<compile_context>
chip_gen: v5e
topology: v5e:2x2
jax: 0.10.0
libtpu: 0.0.40
codegen_flags: <defaults>
</compile_context>

<pallas_src>
import math
import functools

import jax
import jax.numpy as jnp
from jax.experimental import pallas as pl
from jax.experimental.pallas import tpu as pltpu


# --------------------------------------------------------------------------- #
# Fused kernel: (emb*sqrt(D) + pe) followed by all encoder layers.
# grid = (B, nlayers); activation carried across the layer axis in VMEM scratch.
# --------------------------------------------------------------------------- #
def fused_encoder_kernel(emb_ref, pe_ref,
                         wq_ref, bq_ref, wk_ref, bk_ref, wv_ref, bv_ref,
                         wo_ref, bo_ref, ln1g_ref, ln1b_ref,
                         w1_ref, b1_ref, w2_ref, b2_ref,
                         ln2g_ref, ln2b_ref,
                         out_ref, act_ref, *, nhead, emb_scale):
    layer = pl.program_id(1)
    n_layers = pl.num_programs(1)

    # Layer 0: fused embedding scale + positional encoding (init the resident act).
    @pl.when(layer == 0)
    def _init():
        act_ref[...] = emb_ref[...] * emb_scale + pe_ref[...]
    # TODO(synk): dropout(p=0.5) after pos-encoding / inside layers is identity (eval mode).

    x = act_ref[...]                                    # (S, D) f32, resident across layers
    S, D = x.shape
    hd = D // nhead
    inv_sqrt_hd = 1.0 / math.sqrt(hd)
    f32, bf16 = jnp.float32, jnp.bfloat16

    def layer_norm(v, g, b):                            # keep LN math in f32 (no bf16 VPU on v5e)
        mu = jnp.mean(v, axis=-1, keepdims=True)
        var = jnp.mean(jnp.square(v - mu), axis=-1, keepdims=True)
        return (v - mu) * jax.lax.rsqrt(var + 1e-5) * g + b

    xb = x.astype(bf16)

    # ---- multi-head self-attention: heads batched, no per-head lane slices ----
    q = jnp.dot(xb, wq_ref[...].astype(bf16), preferred_element_type=f32) + bq_ref[...]
    k = jnp.dot(xb, wk_ref[...].astype(bf16), preferred_element_type=f32) + bk_ref[...]
    v = jnp.dot(xb, wv_ref[...].astype(bf16), preferred_element_type=f32) + bv_ref[...]
    # one head-major relayout per tensor (instead of nhead narrow lane slices)
    qh = jnp.swapaxes(q.reshape(S, nhead, hd), 0, 1)    # (H, S, hd) f32
    kh = jnp.swapaxes(k.reshape(S, nhead, hd), 0, 1)
    vh = jnp.swapaxes(v.reshape(S, nhead, hd), 0, 1)

    scores = jnp.einsum('hqd,hkd->hqk', qh.astype(bf16), kh.astype(bf16),
                        preferred_element_type=f32) * inv_sqrt_hd          # (H, S, S) f32

    # causal mask built in-kernel (finite negative instead of -inf; no (S,S) DMA per layer)
    row = jax.lax.broadcasted_iota(jnp.int32, (S, S), 0)
    col = jax.lax.broadcasted_iota(jnp.int32, (S, S), 1)
    scores = jnp.where((col <= row)[None, :, :], scores, -1e30)

    m = jnp.max(scores, axis=-1, keepdims=True)
    e = jnp.exp(scores - m)                                                 # f32 on EUP
    p = e * pl.reciprocal(jnp.sum(e, axis=-1, keepdims=True), approx=True)  # EUP divide

    ctx = jnp.einsum('hqk,hkd->hqd', p.astype(bf16), vh.astype(bf16),
                     preferred_element_type=f32)                            # (H, S, hd)
    ctx = jnp.swapaxes(ctx, 0, 1).reshape(S, D)                             # concat heads
    attn = jnp.dot(ctx.astype(bf16), wo_ref[...].astype(bf16),
                   preferred_element_type=f32) + bo_ref[...]                # one wide matmul

    y = layer_norm(x + attn, ln1g_ref[...], ln1b_ref[...])

    # ---- feed-forward (bf16 matmul inputs, f32 accumulate, ReLU) ----
    h1 = jnp.maximum(jnp.dot(y.astype(bf16), w1_ref[...].astype(bf16),
                             preferred_element_type=f32) + b1_ref[...], 0.0)
    ff = jnp.dot(h1.astype(bf16), w2_ref[...].astype(bf16),
                 preferred_element_type=f32) + b2_ref[...]
    z = layer_norm(y + ff, ln2g_ref[...], ln2b_ref[...])

    act_ref[...] = z                                    # carry to next layer (stays in VMEM)

    @pl.when(layer == n_layers - 1)
    def _finalize():
        out_ref[...] = z                                # single HBM writeback per batch tile


# --------------------------------------------------------------------------- #
# Parameter / constant construction (plain JAX glue)
# --------------------------------------------------------------------------- #
def make_positional_encoding(max_len, d):
    pos = jnp.arange(max_len, dtype=jnp.float32)[:, None]
    div = jnp.exp(jnp.arange(0, d, 2, dtype=jnp.float32) * (-math.log(10000.0) / d))
    pe = jnp.zeros((max_len, d), jnp.float32)
    pe = pe.at[:, 0::2].set(jnp.sin(pos * div))
    pe = pe.at[:, 1::2].set(jnp.cos(pos * div))
    return pe


def init_params(key, ntoken, ninp, nhead, nhid, nlayers, max_len=128):
    keys = jax.random.split(key, 7)
    L, D, H = nlayers, ninp, nhid
    scale = 0.05
    return {
        'embedding': jax.random.uniform(keys[0], (ntoken, D), jnp.float32, -0.1, 0.1),
        'pos_encoding': make_positional_encoding(max_len, D),
        # per-layer weights stacked on a leading layer axis (streamed by BlockSpec)
        'w_q': scale * jax.random.normal(keys[1], (L, D, D), jnp.float32),
        'w_k': scale * jax.random.normal(keys[2], (L, D, D), jnp.float32),
        'w_v': scale * jax.random.normal(keys[3], (L, D, D), jnp.float32),
        'w_o': scale * jax.random.normal(keys[4], (L, D, D), jnp.float32),
        'b_q': jnp.zeros((L, 1, D), jnp.float32),
        'b_k': jnp.zeros((L, 1, D), jnp.float32),
        'b_v': jnp.zeros((L, 1, D), jnp.float32),
        'b_o': jnp.zeros((L, 1, D), jnp.float32),
        'ln1_g': jnp.ones((L, 1, D), jnp.float32),
        'ln1_b': jnp.zeros((L, 1, D), jnp.float32),
        'w1': scale * jax.random.normal(keys[5], (L, D, H), jnp.float32),
        'b1': jnp.zeros((L, 1, H), jnp.float32),
        'w2': scale * jax.random.normal(keys[6], (L, H, D), jnp.float32),
        'b2': jnp.zeros((L, 1, D), jnp.float32),
        'ln2_g': jnp.ones((L, 1, D), jnp.float32),
        'ln2_b': jnp.zeros((L, 1, D), jnp.float32),
    }


# --------------------------------------------------------------------------- #
# Forward wrapper (PyTorch seq-first convention at the boundary)
# --------------------------------------------------------------------------- #
@functools.partial(jax.jit, static_argnames=('nhead',))
def transformer_forward(src_tokens, params, *, nhead):
    S, B = src_tokens.shape
    emb_table = params['embedding']
    D = emb_table.shape[1]
    H = params['w1'].shape[-1]
    L = params['w_q'].shape[0]

    # glue: data-dependent embedding gather in plain JAX
    emb = jnp.transpose(emb_table[src_tokens], (1, 0, 2))     # (B, S, D)
    pe = params['pos_encoding'][:S]                           # (S, D), not broadcast in HBM

    def wspec(shape):   # per-layer weight block: stream layer `l`, full-resident in VMEM
        return pl.BlockSpec(shape, lambda b, l: (l, 0, 0))

    grid_spec = pltpu.PrefetchScalarGridSpec(
        num_scalar_prefetch=0,
        grid=(B, L),                                          # batch outer, layers inner
        in_specs=[
            pl.BlockSpec((None, S, D), lambda b, l: (b, 0, 0)),   # emb (fetched once per b)
            pl.BlockSpec((S, D), lambda b, l: (0, 0)),            # positional encoding
            wspec((None, D, D)), wspec((None, 1, D)),             # w_q, b_q
            wspec((None, D, D)), wspec((None, 1, D)),             # w_k, b_k
            wspec((None, D, D)), wspec((None, 1, D)),             # w_v, b_v
            wspec((None, D, D)), wspec((None, 1, D)),             # w_o, b_o
            wspec((None, 1, D)), wspec((None, 1, D)),             # ln1_g, ln1_b
            wspec((None, D, H)), wspec((None, 1, H)),             # w1, b1
            wspec((None, H, D)), wspec((None, 1, D)),             # w2, b2
            wspec((None, 1, D)), wspec((None, 1, D)),             # ln2_g, ln2_b
        ],
        out_specs=pl.BlockSpec((None, S, D), lambda b, l: (b, 0, 0)),
        scratch_shapes=[pltpu.VMEM((S, D), jnp.float32)],         # activation carried across layers
    )

    out = pl.pallas_call(
        functools.partial(fused_encoder_kernel, nhead=nhead, emb_scale=math.sqrt(D)),
        grid_spec=grid_spec,
        out_shape=jax.ShapeDtypeStruct((B, S, D), jnp.float32),
        compiler_params=pltpu.CompilerParams(
            dimension_semantics=("parallel", "arbitrary"),        # batch -> both TCs on v7x
            vmem_limit_bytes=48 * 1024 * 1024,                    # sized with headroom for v7x 64 MiB
        ),
    )(emb, pe,
      params['w_q'], params['b_q'], params['w_k'], params['b_k'],
      params['w_v'], params['b_v'], params['w_o'], params['b_o'],
      params['ln1_g'], params['ln1_b'],
      params['w1'], params['b1'], params['w2'], params['b2'],
      params['ln2_g'], params['ln2_b'])

    return jnp.transpose(out, (1, 0, 2))                          # back to (S, B, D)


if __name__ == "__main__":
    ntoken, ninp, nhead, nhid, nlayers = 50, 32, 4, 64, 2
    S, B = 8, 2

    key = jax.random.PRNGKey(0)
    pkey, tkey = jax.random.split(key)
    params = init_params(pkey, ntoken, ninp, nhead, nhid, nlayers)
    src = jax.random.randint(tkey, (S, B), 0, ntoken, dtype=jnp.int32)

    out = transformer_forward(src, params, nhead=nhead)
    out = jax.block_until_ready(out)

    assert out.shape == (S, B, ninp), out.shape
    assert bool(jnp.all(jnp.isfinite(out)))
    print("KERNEL_OK")
</pallas_src>

<mosaic_0001>
module attributes {stable_mosaic.version = 11 : i64} {
  func.func @fused_encoder_kernel(%arg0: i32, %arg1: i32, %arg2: memref<1x8x32xf32, #tpu.memory_space<vmem>>, %arg3: memref<8x32xf32, #tpu.memory_space<vmem>>, %arg4: memref<1x32x32xf32, #tpu.memory_space<vmem>>, %arg5: memref<1x1x32xf32, #tpu.memory_space<vmem>>, %arg6: memref<1x32x32xf32, #tpu.memory_space<vmem>>, %arg7: memref<1x1x32xf32, #tpu.memory_space<vmem>>, %arg8: memref<1x32x32xf32, #tpu.memory_space<vmem>>, %arg9: memref<1x1x32xf32, #tpu.memory_space<vmem>>, %arg10: memref<1x32x32xf32, #tpu.memory_space<vmem>>, %arg11: memref<1x1x32xf32, #tpu.memory_space<vmem>>, %arg12: memref<1x1x32xf32, #tpu.memory_space<vmem>>, %arg13: memref<1x1x32xf32, #tpu.memory_space<vmem>>, %arg14: memref<1x32x64xf32, #tpu.memory_space<vmem>>, %arg15: memref<1x1x64xf32, #tpu.memory_space<vmem>>, %arg16: memref<1x64x32xf32, #tpu.memory_space<vmem>>, %arg17: memref<1x1x32xf32, #tpu.memory_space<vmem>>, %arg18: memref<1x1x32xf32, #tpu.memory_space<vmem>>, %arg19: memref<1x1x32xf32, #tpu.memory_space<vmem>>, %arg20: memref<1x8x32xf32, #tpu.memory_space<vmem>>, %arg21: memref<8x32xf32, #tpu.memory_space<vmem>>) attributes {dimension_semantics = [#tpu.dimension_semantics<parallel>, #tpu.dimension_semantics<arbitrary>], iteration_bounds = array<i64: 2, 2>, scalar_prefetch = 0 : i64, scratch_operands = 1 : i64, tpu.core_type = #tpu.core_type<tc>, window_params = [{transform_indices = @transform_0, window_bounds = array<i64: 1, 8, 32>}, {pipeline_mode = #tpu.pipeline_mode<synchronous>, transform_indices = @transform_1, window_bounds = array<i64: 8, 32>}, {transform_indices = @transform_2, window_bounds = array<i64: 1, 32, 32>}, {transform_indices = @transform_3, window_bounds = array<i64: 1, 1, 32>}, {transform_indices = @transform_4, window_bounds = array<i64: 1, 32, 32>}, {transform_indices = @transform_5, window_bounds = array<i64: 1, 1, 32>}, {transform_indices = @transform_6, window_bounds = array<i64: 1, 32, 32>}, {transform_indices = @transform_7, window_bounds = array<i64: 1, 1, 32>}, {transform_indices = @transform_8, window_bounds = array<i64: 1, 32, 32>}, {transform_indices = @transform_9, window_bounds = array<i64: 1, 1, 32>}, {transform_indices = @transform_10, window_bounds = array<i64: 1, 1, 32>}, {transform_indices = @transform_11, window_bounds = array<i64: 1, 1, 32>}, {transform_indices = @transform_12, window_bounds = array<i64: 1, 32, 64>}, {transform_indices = @transform_13, window_bounds = array<i64: 1, 1, 64>}, {transform_indices = @transform_14, window_bounds = array<i64: 1, 64, 32>}, {transform_indices = @transform_15, window_bounds = array<i64: 1, 1, 32>}, {transform_indices = @transform_16, window_bounds = array<i64: 1, 1, 32>}, {transform_indices = @transform_17, window_bounds = array<i64: 1, 1, 32>}, {transform_indices = @transform_18, window_bounds = array<i64: 1, 8, 32>}]} {
    %c0_i32 = arith.constant 0 : i32
    %0 = arith.cmpi eq, %arg1, %c0_i32 : i32
    %1 = arith.extui %0 : i1 to i32
    %c0_i32_0 = arith.constant 0 : i32
    %2 = arith.cmpi ne, %1, %c0_i32_0 : i32
    scf.if %2 {
      %c0_75 = arith.constant 0 : index
      %c0_76 = arith.constant 0 : index
      %c0_77 = arith.constant 0 : index
      %150 = vector.load %arg2[%c0_75, %c0_76, %c0_77] : memref<1x8x32xf32, #tpu.memory_space<vmem>>, vector<1x8x32xf32>
      %151 = vector.shape_cast %150 : vector<1x8x32xf32> to vector<8x32xf32>
      %cst_78 = arith.constant 5.65685415 : f32
      %152 = vector.broadcast %cst_78 : f32 to vector<8x32xf32>
      %153 = arith.mulf %151, %152 : vector<8x32xf32>
      %c0_79 = arith.constant 0 : index
      %c0_80 = arith.constant 0 : index
      %154 = vector.load %arg3[%c0_79, %c0_80] : memref<8x32xf32, #tpu.memory_space<vmem>>, vector<8x32xf32>
      %155 = arith.addf %153, %154 : vector<8x32xf32>
      %c0_81 = arith.constant 0 : index
      %c0_82 = arith.constant 0 : index
      %156 = vector.load %arg21[%c0_81, %c0_82] : memref<8x32xf32, #tpu.memory_space<vmem>>, vector<8x32xf32>
      tpu.vector_store %arg21[%c0_81, %c0_82], %155 {strides = array<i32>} : memref<8x32xf32, #tpu.memory_space<vmem>>, vector<8x32xf32>,
    } else {
    }
    %c0 = arith.constant 0 : index
    %c0_1 = arith.constant 0 : index
    %3 = vector.load %arg21[%c0, %c0_1] : memref<8x32xf32, #tpu.memory_space<vmem>>, vector<8x32xf32>
    %4 = arith.truncf %3 : vector<8x32xf32> to vector<8x32xbf16>
    %c0_2 = arith.constant 0 : index
    %c0_3 = arith.constant 0 : index
    %c0_4 = arith.constant 0 : index
    %5 = vector.load %arg4[%c0_2, %c0_3, %c0_4] : memref<1x32x32xf32, #tpu.memory_space<vmem>>, vector<1x32x32xf32>
    %6 = vector.shape_cast %5 : vector<1x32x32xf32> to vector<32x32xf32>
    %7 = arith.truncf %6 : vector<32x32xf32> to vector<32x32xbf16>
    %cst = arith.constant dense<0.000000e+00> : vector<8x32xf32>
    %8 = tpu.matmul %4, %7, %cst {dimension_numbers = #tpu.dot_dimension_numbers<[1], [0], [0], [1], [0, 0, 1, 1], [], []>} : vector<8x32xbf16>, vector<32x32xbf16>, vector<8x32xf32> -> vector<8x32xf32>
    %c0_5 = arith.constant 0 : index
    %c0_6 = arith.constant 0 : index
    %c0_7 = arith.constant 0 : index
    %9 = vector.load %arg5[%c0_5, %c0_6, %c0_7] : memref<1x1x32xf32, #tpu.memory_space<vmem>>, vector<1x1x32xf32>
    %10 = vector.shape_cast %9 : vector<1x1x32xf32> to vector<1x32xf32>
    %11 = vector.broadcast %10 : vector<1x32xf32> to vector<8x32xf32>
    %12 = arith.addf %8, %11 : vector<8x32xf32>
    %c0_8 = arith.constant 0 : index
    %c0_9 = arith.constant 0 : index
    %c0_10 = arith.constant 0 : index
    %13 = vector.load %arg6[%c0_8, %c0_9, %c0_10] : memref<1x32x32xf32, #tpu.memory_space<vmem>>, vector<1x32x32xf32>
    %14 = vector.shape_cast %13 : vector<1x32x32xf32> to vector<32x32xf32>
    %15 = arith.truncf %14 : vector<32x32xf32> to vector<32x32xbf16>
    %cst_11 = arith.constant dense<0.000000e+00> : vector<8x32xf32>
    %16 = tpu.matmul %4, %15, %cst_11 {dimension_numbers = #tpu.dot_dimension_numbers<[1], [0], [0], [1], [0, 0, 1, 1], [], []>} : vector<8x32xbf16>, vector<32x32xbf16>, vector<8x32xf32> -> vector<8x32xf32>
    %c0_12 = arith.constant 0 : index
    %c0_13 = arith.constant 0 : index
    %c0_14 = arith.constant 0 : index
    %17 = vector.load %arg7[%c0_12, %c0_13, %c0_14] : memref<1x1x32xf32, #tpu.memory_space<vmem>>, vector<1x1x32xf32>
    %18 = vector.shape_cast %17 : vector<1x1x32xf32> to vector<1x32xf32>
    %19 = vector.broadcast %18 : vector<1x32xf32> to vector<8x32xf32>
    %20 = arith.addf %16, %19 : vector<8x32xf32>
    %c0_15 = arith.constant 0 : index
    %c0_16 = arith.constant 0 : index
    %c0_17 = arith.constant 0 : index
    %21 = vector.load %arg8[%c0_15, %c0_16, %c0_17] : memref<1x32x32xf32, #tpu.memory_space<vmem>>, vector<1x32x32xf32>
    %22 = vector.shape_cast %21 : vector<1x32x32xf32> to vector<32x32xf32>
    %23 = arith.truncf %22 : vector<32x32xf32> to vector<32x32xbf16>
    %cst_18 = arith.constant dense<0.000000e+00> : vector<8x32xf32>
    %24 = tpu.matmul %4, %23, %cst_18 {dimension_numbers = #tpu.dot_dimension_numbers<[1], [0], [0], [1], [0, 0, 1, 1], [], []>} : vector<8x32xbf16>, vector<32x32xbf16>, vector<8x32xf32> -> vector<8x32xf32>
    %c0_19 = arith.constant 0 : index
    %c0_20 = arith.constant 0 : index
    %c0_21 = arith.constant 0 : index
    %25 = vector.load %arg9[%c0_19, %c0_20, %c0_21] : memref<1x1x32xf32, #tpu.memory_space<vmem>>, vector<1x1x32xf32>
    %26 = vector.shape_cast %25 : vector<1x1x32xf32> to vector<1x32xf32>
    %27 = vector.broadcast %26 : vector<1x32xf32> to vector<8x32xf32>
    %28 = arith.addf %24, %27 : vector<8x32xf32>
    %29 = vector.shape_cast %12 : vector<8x32xf32> to vector<8x4x8xf32>
    %30 = tpu.transpose %29, [1, 0, 2] : vector<8x4x8xf32> -> vector<4x8x8xf32>
    %31 = vector.shape_cast %20 : vector<8x32xf32> to vector<8x4x8xf32>
    %32 = tpu.transpose %31, [1, 0, 2] : vector<8x4x8xf32> -> vector<4x8x8xf32>
    %33 = vector.shape_cast %28 : vector<8x32xf32> to vector<8x4x8xf32>
    %34 = tpu.transpose %33, [1, 0, 2] : vector<8x4x8xf32> -> vector<4x8x8xf32>
    %35 = arith.truncf %30 : vector<4x8x8xf32> to vector<4x8x8xbf16>
    %36 = arith.truncf %32 : vector<4x8x8xf32> to vector<4x8x8xbf16>
    "tpu.trace_start"() <{level = 10 : i32, message = "hqd,hkd->hqk"}> : () -> ()
    %cst_22 = arith.constant dense<0.000000e+00> : vector<4x8x8xf32>
    %37 = tpu.matmul %35, %36, %cst_22 {dimension_numbers = #tpu.dot_dimension_numbers<[2], [2], [1], [1], [0, 0, 0, 1, 1, 1], [0], [0]>} : vector<4x8x8xbf16>, vector<4x8x8xbf16>, vector<4x8x8xf32> -> vector<4x8x8xf32>
    "tpu.trace_stop"() : () -> ()
    %cst_23 = arith.constant 0.353553385 : f32
    %38 = vector.broadcast %cst_23 : f32 to vector<4x8x8xf32>
    %39 = arith.mulf %37, %38 : vector<4x8x8xf32>
    %40 = tpu.iota {dimensions = array<i32: 0>} : vector<8x8xi32>
    %41 = tpu.iota {dimensions = array<i32: 1>} : vector<8x8xi32>
    %42 = arith.cmpi sle, %41, %40 : vector<8x8xi32>
    %43 = vector.shape_cast %42 : vector<8x8xi1> to vector<1x8x8xi1>
    %cst_24 = arith.constant -1.000000e+30 : f32
    %44 = vector.shape_cast %43 : vector<1x8x8xi1> to vector<1x8x8xi1>
    %45 = vector.broadcast %44 : vector<1x8x8xi1> to vector<4x8x8xi1>
    %46 = vector.broadcast %cst_24 : f32 to vector<4x8x8xf32>
    %47 = arith.select %45, %39, %46 : vector<4x8x8xi1>, vector<4x8x8xf32>
    %cst_25 = arith.constant dense<0xFF800000> : vector<4x8xf32>
    %48 = vector.multi_reduction <maximumf>, %47, %cst_25 [2] : vector<4x8x8xf32> to vector<4x8xf32>
    %49 = vector.shape_cast %48 : vector<4x8xf32> to vector<4x8x1xf32>
    %50 = vector.broadcast %49 : vector<4x8x1xf32> to vector<4x8x8xf32>
    %51 = arith.subf %47, %50 : vector<4x8x8xf32>
    %52 = math.exp %51 : vector<4x8x8xf32>
    %cst_26 = arith.constant dense<0.000000e+00> : vector<4x8xf32>
    %53 = vector.multi_reduction <add>, %52, %cst_26 [2] : vector<4x8x8xf32> to vector<4x8xf32>
    %54 = vector.shape_cast %53 : vector<4x8xf32> to vector<4x8x1xf32>
    %55 = tpu.reciprocal %54 {approx = true} : vector<4x8x1xf32> -> vector<4x8x1xf32>
    %56 = vector.broadcast %55 : vector<4x8x1xf32> to vector<4x8x8xf32>
    %57 = arith.mulf %52, %56 : vector<4x8x8xf32>
    %58 = arith.truncf %57 : vector<4x8x8xf32> to vector<4x8x8xbf16>
    %59 = arith.truncf %34 : vector<4x8x8xf32> to vector<4x8x8xbf16>
    "tpu.trace_start"() <{level = 10 : i32, message = "hqk,hkd->hqd"}> : () -> ()
    %cst_27 = arith.constant dense<0.000000e+00> : vector<4x8x8xf32>
    %60 = tpu.matmul %58, %59, %cst_27 {dimension_numbers = #tpu.dot_dimension_numbers<[2], [1], [1], [2], [0, 0, 0, 1, 1, 2], [0], [0]>} : vector<4x8x8xbf16>, vector<4x8x8xbf16>, vector<4x8x8xf32> -> vector<4x8x8xf32>
    "tpu.trace_stop"() : () -> ()
    %61 = tpu.transpose %60, [1, 0, 2] : vector<4x8x8xf32> -> vector<8x4x8xf32>
    %62 = vector.shape_cast %61 : vector<8x4x8xf32> to vector<8x32xf32>
    %63 = arith.truncf %62 : vector<8x32xf32> to vector<8x32xbf16>
    %c0_28 = arith.constant 0 : index
    %c0_29 = arith.constant 0 : index
    %c0_30 = arith.constant 0 : index
    %64 = vector.load %arg10[%c0_28, %c0_29, %c0_30] : memref<1x32x32xf32, #tpu.memory_space<vmem>>, vector<1x32x32xf32>
    %65 = vector.shape_cast %64 : vector<1x32x32xf32> to vector<32x32xf32>
    %66 = arith.truncf %65 : vector<32x32xf32> to vector<32x32xbf16>
    %cst_31 = arith.constant dense<0.000000e+00> : vector<8x32xf32>
    %67 = tpu.matmul %63, %66, %cst_31 {dimension_numbers = #tpu.dot_dimension_numbers<[1], [0], [0], [1], [0, 0, 1, 1], [], []>} : vector<8x32xbf16>, vector<32x32xbf16>, vector<8x32xf32> -> vector<8x32xf32>
    %c0_32 = arith.constant 0 : index
    %c0_33 = arith.constant 0 : index
    %c0_34 = arith.constant 0 : index
    %68 = vector.load %arg11[%c0_32, %c0_33, %c0_34] : memref<1x1x32xf32, #tpu.memory_space<vmem>>, vector<1x1x32xf32>
    %69 = vector.shape_cast %68 : vector<1x1x32xf32> to vector<1x32xf32>
    %70 = vector.broadcast %69 : vector<1x32xf32> to vector<8x32xf32>
    %71 = arith.addf %67, %70 : vector<8x32xf32>
    %72 = arith.addf %3, %71 : vector<8x32xf32>
    %c0_35 = arith.constant 0 : index
    %c0_36 = arith.constant 0 : index
    %c0_37 = arith.constant 0 : index
    %73 = vector.load %arg12[%c0_35, %c0_36, %c0_37] : memref<1x1x32xf32, #tpu.memory_space<vmem>>, vector<1x1x32xf32>
    %74 = vector.shape_cast %73 : vector<1x1x32xf32> to vector<1x32xf32>
    %c0_38 = arith.constant 0 : index
    %c0_39 = arith.constant 0 : index
    %c0_40 = arith.constant 0 : index
    %75 = vector.load %arg13[%c0_38, %c0_39, %c0_40] : memref<1x1x32xf32, #tpu.memory_space<vmem>>, vector<1x1x32xf32>
    %76 = vector.shape_cast %75 : vector<1x1x32xf32> to vector<1x32xf32>
    %cst_41 = arith.constant dense<0.000000e+00> : vector<8xf32>
    %77 = vector.multi_reduction <add>, %72, %cst_41 [1] : vector<8x32xf32> to vector<8xf32>
    %78 = vector.shape_cast %77 : vector<8xf32> to vector<8x1xf32>
    %cst_42 = arith.constant 3.200000e+01 : f32
    %79 = vector.broadcast %cst_42 : f32 to vector<8x1xf32>
    %80 = arith.divf %78, %79 : vector<8x1xf32>
    %81 = vector.broadcast %80 : vector<8x1xf32> to vector<8x32xf32>
    %82 = arith.subf %72, %81 : vector<8x32xf32>
    %83 = arith.mulf %82, %82 : vector<8x32xf32>
    %cst_43 = arith.constant dense<0.000000e+00> : vector<8xf32>
    %84 = vector.multi_reduction <add>, %83, %cst_43 [1] : vector<8x32xf32> to vector<8xf32>
    %85 = vector.shape_cast %84 : vector<8xf32> to vector<8x1xf32>
    %cst_44 = arith.constant 3.200000e+01 : f32
    %86 = vector.broadcast %cst_44 : f32 to vector<8x1xf32>
    %87 = arith.divf %85, %86 : vector<8x1xf32>
    %88 = vector.broadcast %80 : vector<8x1xf32> to vector<8x32xf32>
    %89 = arith.subf %72, %88 : vector<8x32xf32>
    %cst_45 = arith.constant 9.99999974E-6 : f32
    %90 = vector.broadcast %cst_45 : f32 to vector<8x1xf32>
    %91 = arith.addf %87, %90 : vector<8x1xf32>
    %92 = math.rsqrt %91 : vector<8x1xf32>
    %93 = vector.broadcast %92 : vector<8x1xf32> to vector<8x32xf32>
    %94 = arith.mulf %89, %93 : vector<8x32xf32>
    %95 = vector.broadcast %74 : vector<1x32xf32> to vector<8x32xf32>
    %96 = arith.mulf %94, %95 : vector<8x32xf32>
    %97 = vector.broadcast %76 : vector<1x32xf32> to vector<8x32xf32>
    %98 = arith.addf %96, %97 : vector<8x32xf32>
    %99 = arith.truncf %98 : vector<8x32xf32> to vector<8x32xbf16>
    %c0_46 = arith.constant 0 : index
    %c0_47 = arith.constant 0 : index
    %c0_48 = arith.constant 0 : index
    %100 = vector.load %arg14[%c0_46, %c0_47, %c0_48] : memref<1x32x64xf32, #tpu.memory_space<vmem>>, vector<1x32x64xf32>
    %101 = vector.shape_cast %100 : vector<1x32x64xf32> to vector<32x64xf32>
    %102 = arith.truncf %101 : vector<32x64xf32> to vector<32x64xbf16>
    %cst_49 = arith.constant dense<0.000000e+00> : vector<8x64xf32>
    %103 = tpu.matmul %99, %102, %cst_49 {dimension_numbers = #tpu.dot_dimension_numbers<[1], [0], [0], [1], [0, 0, 1, 1], [], []>} : vector<8x32xbf16>, vector<32x64xbf16>, vector<8x64xf32> -> vector<8x64xf32>
    %c0_50 = arith.constant 0 : index
    %c0_51 = arith.constant 0 : index
    %c0_52 = arith.constant 0 : index
    %104 = vector.load %arg15[%c0_50, %c0_51, %c0_52] : memref<1x1x64xf32, #tpu.memory_space<vmem>>, vector<1x1x64xf32>
    %105 = vector.shape_cast %104 : vector<1x1x64xf32> to vector<1x64xf32>
    %106 = vector.broadcast %105 : vector<1x64xf32> to vector<8x64xf32>
    %107 = arith.addf %103, %106 : vector<8x64xf32>
    %cst_53 = arith.constant 0.000000e+00 : f32
    %108 = vector.broadcast %cst_53 : f32 to vector<8x64xf32>
    %109 = arith.maximumf %107, %108 : vector<8x64xf32>
    %110 = arith.truncf %109 : vector<8x64xf32> to vector<8x64xbf16>
    %c0_54 = arith.constant 0 : index
    %c0_55 = arith.constant 0 : index
    %c0_56 = arith.constant 0 : index
    %111 = vector.load %arg16[%c0_54, %c0_55, %c0_56] : memref<1x64x32xf32, #tpu.memory_space<vmem>>, vector<1x64x32xf32>
    %112 = vector.shape_cast %111 : vector<1x64x32xf32> to vector<64x32xf32>
    %113 = arith.truncf %112 : vector<64x32xf32> to vector<64x32xbf16>
    %cst_57 = arith.constant dense<0.000000e+00> : vector<8x32xf32>
    %114 = tpu.matmul %110, %113, %cst_57 {dimension_numbers = #tpu.dot_dimension_numbers<[1], [0], [0], [1], [0, 0, 1, 1], [], []>} : vector<8x64xbf16>, vector<64x32xbf16>, vector<8x32xf32> -> vector<8x32xf32>
    %c0_58 = arith.constant 0 : index
    %c0_59 = arith.constant 0 : index
    %c0_60 = arith.constant 0 : index
    %115 = vector.load %arg17[%c0_58, %c0_59, %c0_60] : memref<1x1x32xf32, #tpu.memory_space<vmem>>, vector<1x1x32xf32>
    %116 = vector.shape_cast %115 : vector<1x1x32xf32> to vector<1x32xf32>
    %117 = vector.broadcast %116 : vector<1x32xf32> to vector<8x32xf32>
    %118 = arith.addf %114, %117 : vector<8x32xf32>
    %119 = arith.addf %98, %118 : vector<8x32xf32>
    %c0_61 = arith.constant 0 : index
    %c0_62 = arith.constant 0 : index
    %c0_63 = arith.constant 0 : index
    %120 = vector.load %arg18[%c0_61, %c0_62, %c0_63] : memref<1x1x32xf32, #tpu.memory_space<vmem>>, vector<1x1x32xf32>
    %121 = vector.shape_cast %120 : vector<1x1x32xf32> to vector<1x32xf32>
    %c0_64 = arith.constant 0 : index
    %c0_65 = arith.constant 0 : index
    %c0_66 = arith.constant 0 : index
    %122 = vector.load %arg19[%c0_64, %c0_65, %c0_66] : memref<1x1x32xf32, #tpu.memory_space<vmem>>, vector<1x1x32xf32>
    %123 = vector.shape_cast %122 : vector<1x1x32xf32> to vector<1x32xf32>
    %cst_67 = arith.constant dense<0.000000e+00> : vector<8xf32>
    %124 = vector.multi_reduction <add>, %119, %cst_67 [1] : vector<8x32xf32> to vector<8xf32>
    %125 = vector.shape_cast %124 : vector<8xf32> to vector<8x1xf32>
    %cst_68 = arith.constant 3.200000e+01 : f32
    %126 = vector.broadcast %cst_68 : f32 to vector<8x1xf32>
    %127 = arith.divf %125, %126 : vector<8x1xf32>
    %128 = vector.broadcast %127 : vector<8x1xf32> to vector<8x32xf32>
    %129 = arith.subf %119, %128 : vector<8x32xf32>
    %130 = arith.mulf %129, %129 : vector<8x32xf32>
    %cst_69 = arith.constant dense<0.000000e+00> : vector<8xf32>
    %131 = vector.multi_reduction <add>, %130, %cst_69 [1] : vector<8x32xf32> to vector<8xf32>
    %132 = vector.shape_cast %131 : vector<8xf32> to vector<8x1xf32>
    %cst_70 = arith.constant 3.200000e+01 : f32
    %133 = vector.broadcast %cst_70 : f32 to vector<8x1xf32>
    %134 = arith.divf %132, %133 : vector<8x1xf32>
    %135 = vector.broadcast %127 : vector<8x1xf32> to vector<8x32xf32>
    %136 = arith.subf %119, %135 : vector<8x32xf32>
    %cst_71 = arith.constant 9.99999974E-6 : f32
    %137 = vector.broadcast %cst_71 : f32 to vector<8x1xf32>
    %138 = arith.addf %134, %137 : vector<8x1xf32>
    %139 = math.rsqrt %138 : vector<8x1xf32>
    %140 = vector.broadcast %139 : vector<8x1xf32> to vector<8x32xf32>
    %141 = arith.mulf %136, %140 : vector<8x32xf32>
    %142 = vector.broadcast %121 : vector<1x32xf32> to vector<8x32xf32>
    %143 = arith.mulf %141, %142 : vector<8x32xf32>
    %144 = vector.broadcast %123 : vector<1x32xf32> to vector<8x32xf32>
    %145 = arith.addf %143, %144 : vector<8x32xf32>
    %c0_72 = arith.constant 0 : index
    %c0_73 = arith.constant 0 : index
    %146 = vector.load %arg21[%c0_72, %c0_73] : memref<8x32xf32, #tpu.memory_space<vmem>>, vector<8x32xf32>
    tpu.vector_store %arg21[%c0_72, %c0_73], %145 {strides = array<i32>} : memref<8x32xf32, #tpu.memory_space<vmem>>, vector<8x32xf32>,
    %c1_i32 = arith.constant 1 : i32
    %147 = arith.cmpi eq, %arg1, %c1_i32 : i32
    %148 = arith.extui %147 : i1 to i32
    %c0_i32_74 = arith.constant 0 : i32
    %149 = arith.cmpi ne, %148, %c0_i32_74 : i32
    scf.if %149 {
      %c0_75 = arith.constant 0 : index
      %c0_76 = arith.constant 0 : index
      %c0_77 = arith.constant 0 : index
      %150 = vector.load %arg20[%c0_75, %c0_76, %c0_77] : memref<1x8x32xf32, #tpu.memory_space<vmem>>, vector<1x8x32xf32>
      %151 = vector.shape_cast %150 : vector<1x8x32xf32> to vector<8x32xf32>
      %152 = vector.shape_cast %145 : vector<8x32xf32> to vector<1x8x32xf32>
      tpu.vector_store %arg20[%c0_75, %c0_76, %c0_77], %152 {strides = array<i32>} : memref<1x8x32xf32, #tpu.memory_space<vmem>>, vector<1x8x32xf32>,
    } else {
    }
    return
  }
  func.func @transform_0(%arg0: i32, %arg1: i32) -> (i32, i32, i32) {
    %c0_i32 = arith.constant 0 : i32
    %c0_i32_0 = arith.constant 0 : i32
    %c0_i32_1 = arith.constant 0 : i32
    return %arg0, %c0_i32, %c0_i32_0 : i32, i32, i32
  }
  func.func @transform_1(%arg0: i32, %arg1: i32) -> (i32, i32) {
    %c0_i32 = arith.constant 0 : i32
    %c0_i32_0 = arith.constant 0 : i32
    %c0_i32_1 = arith.constant 0 : i32
    return %c0_i32, %c0_i32_0 : i32, i32
  }
  func.func @transform_2(%arg0: i32, %arg1: i32) -> (i32, i32, i32) {
    %c0_i32 = arith.constant 0 : i32
    %c0_i32_0 = arith.constant 0 : i32
    %c0_i32_1 = arith.constant 0 : i32
    return %arg1, %c0_i32, %c0_i32_0 : i32, i32, i32
  }
  func.func @transform_3(%arg0: i32, %arg1: i32) -> (i32, i32, i32) {
    %c0_i32 = arith.constant 0 : i32
    %c0_i32_0 = arith.constant 0 : i32
    %c0_i32_1 = arith.constant 0 : i32
    return %arg1, %c0_i32, %c0_i32_0 : i32, i32, i32
  }
  func.func @transform_4(%arg0: i32, %arg1: i32) -> (i32, i32, i32) {
    %c0_i32 = arith.constant 0 : i32
    %c0_i32_0 = arith.constant 0 : i32
    %c0_i32_1 = arith.constant 0 : i32
    return %arg1, %c0_i32, %c0_i32_0 : i32, i32, i32
  }
  func.func @transform_5(%arg0: i32, %arg1: i32) -> (i32, i32, i32) {
    %c0_i32 = arith.constant 0 : i32
    %c0_i32_0 = arith.constant 0 : i32
    %c0_i32_1 = arith.constant 0 : i32
    return %arg1, %c0_i32, %c0_i32_0 : i32, i32, i32
  }
  func.func @transform_6(%arg0: i32, %arg1: i32) -> (i32, i32, i32) {
    %c0_i32 = arith.constant 0 : i32
    %c0_i32_0 = arith.constant 0 : i32
    %c0_i32_1 = arith.constant 0 : i32
    return %arg1, %c0_i32, %c0_i32_0 : i32, i32, i32
  }
  func.func @transform_7(%arg0: i32, %arg1: i32) -> (i32, i32, i32) {
    %c0_i32 = arith.constant 0 : i32
    %c0_i32_0 = arith.constant 0 : i32
    %c0_i32_1 = arith.constant 0 : i32
    return %arg1, %c0_i32, %c0_i32_0 : i32, i32, i32
  }
  func.func @transform_8(%arg0: i32, %arg1: i32) -> (i32, i32, i32) {
    %c0_i32 = arith.constant 0 : i32
    %c0_i32_0 = arith.constant 0 : i32
    %c0_i32_1 = arith.constant 0 : i32
    return %arg1, %c0_i32, %c0_i32_0 : i32, i32, i32
  }
  func.func @transform_9(%arg0: i32, %arg1: i32) -> (i32, i32, i32) {
    %c0_i32 = arith.constant 0 : i32
    %c0_i32_0 = arith.constant 0 : i32
    %c0_i32_1 = arith.constant 0 : i32
    return %arg1, %c0_i32, %c0_i32_0 : i32, i32, i32
  }
  func.func @transform_10(%arg0: i32, %arg1: i32) -> (i32, i32, i32) {
    %c0_i32 = arith.constant 0 : i32
    %c0_i32_0 = arith.constant 0 : i32
    %c0_i32_1 = arith.constant 0 : i32
    return %arg1, %c0_i32, %c0_i32_0 : i32, i32, i32
  }
  func.func @transform_11(%arg0: i32, %arg1: i32) -> (i32, i32, i32) {
    %c0_i32 = arith.constant 0 : i32
    %c0_i32_0 = arith.constant 0 : i32
    %c0_i32_1 = arith.constant 0 : i32
    return %arg1, %c0_i32, %c0_i32_0 : i32, i32, i32
  }
  func.func @transform_12(%arg0: i32, %arg1: i32) -> (i32, i32, i32) {
    %c0_i32 = arith.constant 0 : i32
    %c0_i32_0 = arith.constant 0 : i32
    %c0_i32_1 = arith.constant 0 : i32
    return %arg1, %c0_i32, %c0_i32_0 : i32, i32, i32
  }
  func.func @transform_13(%arg0: i32, %arg1: i32) -> (i32, i32, i32) {
    %c0_i32 = arith.constant 0 : i32
    %c0_i32_0 = arith.constant 0 : i32
    %c0_i32_1 = arith.constant 0 : i32
    return %arg1, %c0_i32, %c0_i32_0 : i32, i32, i32
  }
  func.func @transform_14(%arg0: i32, %arg1: i32) -> (i32, i32, i32) {
    %c0_i32 = arith.constant 0 : i32
    %c0_i32_0 = arith.constant 0 : i32
    %c0_i32_1 = arith.constant 0 : i32
    return %arg1, %c0_i32, %c0_i32_0 : i32, i32, i32
  }
  func.func @transform_15(%arg0: i32, %arg1: i32) -> (i32, i32, i32) {
    %c0_i32 = arith.constant 0 : i32
    %c0_i32_0 = arith.constant 0 : i32
    %c0_i32_1 = arith.constant 0 : i32
    return %arg1, %c0_i32, %c0_i32_0 : i32, i32, i32
  }
  func.func @transform_16(%arg0: i32, %arg1: i32) -> (i32, i32, i32) {
    %c0_i32 = arith.constant 0 : i32
    %c0_i32_0 = arith.constant 0 : i32
    %c0_i32_1 = arith.constant 0 : i32
    return %arg1, %c0_i32, %c0_i32_0 : i32, i32, i32
  }
  func.func @transform_17(%arg0: i32, %arg1: i32) -> (i32, i32, i32) {
    %c0_i32 = arith.constant 0 : i32
    %c0_i32_0 = arith.constant 0 : i32
    %c0_i32_1 = arith.constant 0 : i32
    return %arg1, %c0_i32, %c0_i32_0 : i32, i32, i32
  }
  func.func @transform_18(%arg0: i32, %arg1: i32) -> (i32, i32, i32) {
    %c0_i32 = arith.constant 0 : i32
    %c0_i32_0 = arith.constant 0 : i32
    %c0_i32_1 = arith.constant 0 : i32
    return %arg0, %c0_i32, %c0_i32_0 : i32, i32, i32
  }
}

</mosaic_0001>

<llo_original>
// kernel: transformer_forward.1
$region0: #{transformer_forward.1}
  #allocation0 [shape = 'u32[]', space=smem, size = 0x4, offset = 0x4, fixed_abs, tag = 'smem constant byte address 0x4 - core index']
  #allocation1 [shape = 'u32[72,128]{1,0:T(1,128)}', space=vmem, size = 0x9000, scoped, tag = 'internal scratch']
  #allocation2 [shape = 'f32[8,32]{1,0:T(8,128)}', space=vmem, size = 0x1000, scoped, tag = 'scratch operand']
  %s0 = inlined_call_operand.vmem [shape: f32[2,8,32], index: 0, kind: input, shape index: {}]
  %s1 = inlined_call_operand.vmem [shape: f32[8,32], index: 1, kind: input, shape index: {}]
  %s2 = inlined_call_operand.vmem [shape: f32[2,32,32], index: 2, kind: input, shape index: {}]
  %s3 = inlined_call_operand.vmem [shape: f32[2,1,32], index: 3, kind: input, shape index: {}]
  %s4 = inlined_call_operand.vmem [shape: f32[2,32,32], index: 4, kind: input, shape index: {}]
  %s5 = inlined_call_operand.vmem [shape: f32[2,1,32], index: 5, kind: input, shape index: {}]
  %s6 = inlined_call_operand.vmem [shape: f32[2,32,32], index: 6, kind: input, shape index: {}]
  %s7 = inlined_call_operand.vmem [shape: f32[2,1,32], index: 7, kind: input, shape index: {}]
  %s8 = inlined_call_operand.vmem [shape: f32[2,32,32], index: 8, kind: input, shape index: {}]
  %s9 = inlined_call_operand.vmem [shape: f32[2,1,32], index: 9, kind: input, shape index: {}]
  %s10 = inlined_call_operand.vmem [shape: f32[2,1,32], index: 10, kind: input, shape index: {}]
  %s11 = inlined_call_operand.vmem [shape: f32[2,1,32], index: 11, kind: input, shape index: {}]
  %s12 = inlined_call_operand.vmem [shape: f32[2,32,64], index: 12, kind: input, shape index: {}]
  %s13 = inlined_call_operand.vmem [shape: f32[2,1,64], index: 13, kind: input, shape index: {}]
  %s14 = inlined_call_operand.vmem [shape: f32[2,64,32], index: 14, kind: input, shape index: {}]
  %s15 = inlined_call_operand.vmem [shape: f32[2,1,32], index: 15, kind: input, shape index: {}]
  %s16 = inlined_call_operand.vmem [shape: f32[2,1,32], index: 16, kind: input, shape index: {}]
  %s17 = inlined_call_operand.vmem [shape: f32[2,1,32], index: 17, kind: input, shape index: {}]
  %s18 = inlined_call_operand.vmem [shape: f32[2,8,32], index: 18, kind: output, shape index: {}]
  %s19 = sld [smem:[#allocation0]]
  $region113: #{transformer_forward.1} parent=0
    _
  %s21 = ssub.s32 1, %s19
  %s22 = scalar_select 0, %s21, %s19
  loop: start=0, step=1, limit=6
  $region2: #{transformer_forward.1} parent=0 // loop_pre_header
    _
  $region3: #{transformer_forward.1} parent=0 // loop_header
    %s24 = sphi 0, %s28
    %p25 = scmp.ge.s32.totalorder %s24, 6
    %s31 = sphi 0, %s43
    %s32 = sphi 0, %s39
    %s33 = sphi 0, %s31
    %s34 = sphi 0, %s32
    %s35 = sphi 0, %s33
    %s36 = sphi 0, %s34
    %s46 = sphi 0, %s48
    %s49 = sphi 0, %s46
    %s50 = sphi 0, %s49
    %s66 = sphi 0, %s50
    %s70 = sphi 0, %s70
    %s72 = sphi 0, %s70
    %s73 = sphi 0, %s72
    %s87 = sphi 0, %s73
    %s93 = sphi 0, %s95
    %s96 = sphi 0, %s93
    %s97 = sphi 0, %s96
    %s113 = sphi 0, %s97
    %s119 = sphi 0, %s121
    %s122 = sphi 0, %s119
    %s123 = sphi 0, %s122
    %s139 = sphi 0, %s123
    %s145 = sphi 0, %s147
    %s148 = sphi 0, %s145
    %s149 = sphi 0, %s148
    %s165 = sphi 0, %s149
    %s171 = sphi 0, %s173
    %s174 = sphi 0, %s171
    %s175 = sphi 0, %s174
    %s191 = sphi 0, %s175
    %s197 = sphi 0, %s199
    %s200 = sphi 0, %s197
    %s201 = sphi 0, %s200
    %s217 = sphi 0, %s201
    %s223 = sphi 0, %s225
    %s226 = sphi 0, %s223
    %s227 = sphi 0, %s226
    %s243 = sphi 0, %s227
    %s249 = sphi 0, %s251
    %s252 = sphi 0, %s249
    %s253 = sphi 0, %s252
    %s269 = sphi 0, %s253
    %s275 = sphi 0, %s277
    %s278 = sphi 0, %s275
    %s279 = sphi 0, %s278
    %s295 = sphi 0, %s279
    %s301 = sphi 0, %s303
    %s304 = sphi 0, %s301
    %s305 = sphi 0, %s304
    %s321 = sphi 0, %s305
    %s327 = sphi 0, %s329
    %s330 = sphi 0, %s327
    %s331 = sphi 0, %s330
    %s347 = sphi 0, %s331
    %s353 = sphi 0, %s355
    %s356 = sphi 0, %s353
    %s357 = sphi 0, %s356
    %s373 = sphi 0, %s357
    %s379 = sphi 0, %s381
    %s382 = sphi 0, %s379
    %s383 = sphi 0, %s382
    %s399 = sphi 0, %s383
    %s405 = sphi 0, %s407
    %s408 = sphi 0, %s405
    %s409 = sphi 0, %s408
    %s425 = sphi 0, %s409
    %s431 = sphi 0, %s433
    %s434 = sphi 0, %s431
    %s435 = sphi 0, %s434
    %s451 = sphi 0, %s435
    %s457 = sphi 0, %s459
    %s460 = sphi 0, %s457
    %s461 = sphi 0, %s460
    %s477 = sphi 0, %s461
    %s483 = sphi 0, %s485
    %s486 = sphi 0, %s483
    %s487 = sphi 0, %s486
    %s503 = sphi 0, %s487
    %s509 = sphi 0, %s511
    %s512 = sphi 0, %s509
    %s513 = sphi 0, %s512
    %s529 = sphi 0, %s513
  $region4: #{transformer_forward.1} parent=0 // loop_header_branch
    %27 = sbr.rel (%p25) target = $region8
  $region5: #{transformer_forward.1} parent=0 // loop_body
    %s29 = ssub.s32 %s24, 1
    %s30 = ssub.s32 %s24, 2
    %s37 = sadd.s32 1, %s32
    %p38 = scmp.ge.s32.totalorder %s37, 2
    %s39 = scalar_select %p38, 0, %s37
    %s40 = sadd.s32 1, %s31
    %s41 = scalar_select %p38, %s40, %s31
    %p42 = scmp.ge.s32.totalorder %s41, 2
    %s43 = scalar_select %p42, 0, %s41
    %s44 = ssub.s32 %s31, %s43
    %p45 = scmp.eq.s32.totalorder %s44, 0
    %s47 = sadd.s32 %s46, 1
    %s48 = scalar_select %p45, %s46, %s47
    %p51 = pneg %p45
    %p52 = scmp.eq.s32.totalorder %s24, 3
    %p53 = por %p51, %p52
    %p54 = scmp.ne.s32.totalorder %s46, %s49
    %p55 = scmp.eq.s32.totalorder %s24, 0
    %p56 = por %p54, %p55
    %p57 = scmp.ne.s32.totalorder %s46, %s49
    %p58 = scmp.eq.s32.totalorder %s29, 3
    %p59 = por %p57, %p58
    %p60 = scmp.ne.s32.totalorder %s49, %s50
    %p61 = scmp.eq.s32.totalorder %s29, 0
    %p62 = por %p60, %p61
    %p63 = scmp.ne.s32.totalorder %s49, %s50
    %p64 = scmp.eq.s32.totalorder %s30, 3
    %p65 = por %p63, %p64
    %p67 = scmp.ne.s32.totalorder %s50, %s66
    %p68 = scmp.eq.s32.totalorder %s30, 0
    %p69 = por %p67, %p68
    %s71 = sadd.s32 %s70, 1
    %p74 = scmp.eq.s32.totalorder %s24, 3
    %p75 = scmp.ne.s32.totalorder %s70, %s72
    %p76 = scmp.eq.s32.totalorder %s24, 0
    %p77 = por %p75, %p76
    %p78 = scmp.ne.s32.totalorder %s70, %s72
    %p79 = scmp.eq.s32.totalorder %s29, 3
    %p80 = por %p78, %p79
    %p81 = scmp.ne.s32.totalorder %s72, %s73
    %p82 = scmp.eq.s32.totalorder %s29, 0
    %p83 = por %p81, %p82
    %p84 = scmp.ne.s32.totalorder %s72, %s73
    %p85 = scmp.eq.s32.totalorder %s30, 3
    %p86 = por %p84, %p85
    %p88 = scmp.ne.s32.totalorder %s73, %s87
    %p89 = scmp.eq.s32.totalorder %s30, 0
    %p90 = por %p88, %p89
    %s91 = ssub.s32 %s32, %s39
    %p92 = scmp.eq.s32.totalorder %s91, 0
    %s94 = sadd.s32 %s93, 1
    %s95 = scalar_select %p92, %s93, %s94
    %p98 = pneg %p92
    %p99 = scmp.eq.s32.totalorder %s24, 3
    %p100 = por %p98, %p99
    %p101 = scmp.ne.s32.totalorder %s93, %s96
    %p102 = scmp.eq.s32.totalorder %s24, 0
    %p103 = por %p101, %p102
    %p104 = scmp.ne.s32.totalorder %s93, %s96
    %p105 = scmp.eq.s32.totalorder %s29, 3
    %p106 = por %p104, %p105
    %p107 = scmp.ne.s32.totalorder %s96, %s97
    %p108 = scmp.eq.s32.totalorder %s29, 0
    %p109 = por %p107, %p108
    %p110 = scmp.ne.s32.totalorder %s96, %s97
    %p111 = scmp.eq.s32.totalorder %s30, 3
    %p112 = por %p110, %p111
    %p114 = scmp.ne.s32.totalorder %s97, %s113
    %p115 = scmp.eq.s32.totalorder %s30, 0
    %p116 = por %p114, %p115
    %s117 = ssub.s32 %s32, %s39
    %p118 = scmp.eq.s32.totalorder %s117, 0
    %s120 = sadd.s32 %s119, 1
    %s121 = scalar_select %p118, %s119, %s120
    %p124 = pneg %p118
    %p125 = scmp.eq.s32.totalorder %s24, 3
    %p126 = por %p124, %p125
    %p127 = scmp.ne.s32.totalorder %s119, %s122
    %p128 = scmp.eq.s32.totalorder %s24, 0
    %p129 = por %p127, %p128
    %p130 = scmp.ne.s32.totalorder %s119, %s122
    %p131 = scmp.eq.s32.totalorder %s29, 3
    %p132 = por %p130, %p131
    %p133 = scmp.ne.s32.totalorder %s122, %s123
    %p134 = scmp.eq.s32.totalorder %s29, 0
    %p135 = por %p133, %p134
    %p136 = scmp.ne.s32.totalorder %s122, %s123
    %p137 = scmp.eq.s32.totalorder %s30, 3
    %p138 = por %p136, %p137
    %p140 = scmp.ne.s32.totalorder %s123, %s139
    %p141 = scmp.eq.s32.totalorder %s30, 0
    %p142 = por %p140, %p141
    %s143 = ssub.s32 %s32, %s39
    %p144 = scmp.eq.s32.totalorder %s143, 0
    %s146 = sadd.s32 %s145, 1
    %s147 = scalar_select %p144, %s145, %s146
    %p150 = pneg %p144
    %p151 = scmp.eq.s32.totalorder %s24, 3
    %p152 = por %p150, %p151
    %p153 = scmp.ne.s32.totalorder %s145, %s148
    %p154 = scmp.eq.s32.totalorder %s24, 0
    %p155 = por %p153, %p154
    %p156 = scmp.ne.s32.totalorder %s145, %s148
    %p157 = scmp.eq.s32.totalorder %s29, 3
    %p158 = por %p156, %p157
    %p159 = scmp.ne.s32.totalorder %s148, %s149
    %p160 = scmp.eq.s32.totalorder %s29, 0
    %p161 = por %p159, %p160
    %p162 = scmp.ne.s32.totalorder %s148, %s149
    %p163 = scmp.eq.s32.totalorder %s30, 3
    %p164 = por %p162, %p163
    %p166 = scmp.ne.s32.totalorder %s149, %s165
    %p167 = scmp.eq.s32.totalorder %s30, 0
    %p168 = por %p166, %p167
    %s169 = ssub.s32 %s32, %s39
    %p170 = scmp.eq.s32.totalorder %s169, 0
    %s172 = sadd.s32 %s171, 1
    %s173 = scalar_select %p170, %s171, %s172
    %p176 = pneg %p170
    %p177 = scmp.eq.s32.totalorder %s24, 3
    %p178 = por %p176, %p177
    %p179 = scmp.ne.s32.totalorder %s171, %s174
    %p180 = scmp.eq.s32.totalorder %s24, 0
    %p181 = por %p179, %p180
    %p182 = scmp.ne.s32.totalorder %s171, %s174
    %p183 = scmp.eq.s32.totalorder %s29, 3
    %p184 = por %p182, %p183
    %p185 = scmp.ne.s32.totalorder %s174, %s175
    %p186 = scmp.eq.s32.totalorder %s29, 0
    %p187 = por %p185, %p186
    %p188 = scmp.ne.s32.totalorder %s174, %s175
    %p189 = scmp.eq.s32.totalorder %s30, 3
    %p190 = por %p188, %p189
    %p192 = scmp.ne.s32.totalorder %s175, %s191
    %p193 = scmp.eq.s32.totalorder %s30, 0
    %p194 = por %p192, %p193
    %s195 = ssub.s32 %s32, %s39
    %p196 = scmp.eq.s32.totalorder %s195, 0
    %s198 = sadd.s32 %s197, 1
    %s199 = scalar_select %p196, %s197, %s198
    %p202 = pneg %p196
    %p203 = scmp.eq.s32.totalorder %s24, 3
    %p204 = por %p202, %p203
    %p205 = scmp.ne.s32.totalorder %s197, %s200
    %p206 = scmp.eq.s32.totalorder %s24, 0
    %p207 = por %p205, %p206
    %p208 = scmp.ne.s32.totalorder %s197, %s200
    %p209 = scmp.eq.s32.totalorder %s29, 3
    %p210 = por %p208, %p209
    %p211 = scmp.ne.s32.totalorder %s200, %s201
    %p212 = scmp.eq.s32.totalorder %s29, 0
    %p213 = por %p211, %p212
    %p214 = scmp.ne.s32.totalorder %s200, %s201
    %p215 = scmp.eq.s32.totalorder %s30, 3
    %p216 = por %p214, %p215
    %p218 = scmp.ne.s32.totalorder %s201, %s217
    %p219 = scmp.eq.s32.totalorder %s30, 0
    %p220 = por %p218, %p219
    %s221 = ssub.s32 %s32, %s39
    %p222 = scmp.eq.s32.totalorder %s221, 0
    %s224 = sadd.s32 %s223, 1
    %s225 = scalar_select %p222, %s223, %s224
    %p228 = pneg %p222
    %p229 = scmp.eq.s32.totalorder %s24, 3
    %p230 = por %p228, %p229
    %p231 = scmp.ne.s32.totalorder %s223, %s226
    %p232 = scmp.eq.s32.totalorder %s24, 0
    %p233 = por %p231, %p232
    %p234 = scmp.ne.s32.totalorder %s223, %s226
    %p235 = scmp.eq.s32.totalorder %s29, 3
    %p236 = por %p234, %p235
    %p237 = scmp.ne.s32.totalorder %s226, %s227
    %p238 = scmp.eq.s32.totalorder %s29, 0
    %p239 = por %p237, %p238
    %p240 = scmp.ne.s32.totalorder %s226, %s227
    %p241 = scmp.eq.s32.totalorder %s30, 3
    %p242 = por %p240, %p241
    %p244 = scmp.ne.s32.totalorder %s227, %s243
    %p245 = scmp.eq.s32.totalorder %s30, 0
    %p246 = por %p244, %p245
    %s247 = ssub.s32 %s32, %s39
    %p248 = scmp.eq.s32.totalorder %s247, 0
    %s250 = sadd.s32 %s249, 1
    %s251 = scalar_select %p248, %s249, %s250
    %p254 = pneg %p248
    %p255 = scmp.eq.s32.totalorder %s24, 3
    %p256 = por %p254, %p255
    %p257 = scmp.ne.s32.totalorder %s249, %s252
    %p258 = scmp.eq.s32.totalorder %s24, 0
    %p259 = por %p257, %p258
    %p260 = scmp.ne.s32.totalorder %s249, %s252
    %p261 = scmp.eq.s32.totalorder %s29, 3
    %p262 = por %p260, %p261
    %p263 = scmp.ne.s32.totalorder %s252, %s253
    %p264 = scmp.eq.s32.totalorder %s29, 0
    %p265 = por %p263, %p264
    %p266 = scmp.ne.s32.totalorder %s252, %s253
    %p267 = scmp.eq.s32.totalorder %s30, 3
    %p268 = por %p266, %p267
    %p270 = scmp.ne.s32.totalorder %s253, %s269
    %p271 = scmp.eq.s32.totalorder %s30, 0
    %p272 = por %p270, %p271
    %s273 = ssub.s32 %s32, %s39
    %p274 = scmp.eq.s32.totalorder %s273, 0
    %s276 = sadd.s32 %s275, 1
    %s277 = scalar_select %p274, %s275, %s276
    %p280 = pneg %p274
    %p281 = scmp.eq.s32.totalorder %s24, 3
    %p282 = por %p280, %p281
    %p283 = scmp.ne.s32.totalorder %s275, %s278
    %p284 = scmp.eq.s32.totalorder %s24, 0
    %p285 = por %p283, %p284
    %p286 = scmp.ne.s32.totalorder %s275, %s278
    %p287 = scmp.eq.s32.totalorder %s29, 3
    %p288 = por %p286, %p287
    %p289 = scmp.ne.s32.totalorder %s278, %s279
    %p290 = scmp.eq.s32.totalorder %s29, 0
    %p291 = por %p289, %p290
    %p292 = scmp.ne.s32.totalorder %s278, %s279
    %p293 = scmp.eq.s32.totalorder %s30, 3
    %p294 = por %p292, %p293
    %p296 = scmp.ne.s32.totalorder %s279, %s295
    %p297 = scmp.eq.s32.totalorder %s30, 0
    %p298 = por %p296, %p297
    %s299 = ssub.s32 %s32, %s39
    %p300 = scmp.eq.s32.totalorder %s299, 0
    %s302 = sadd.s32 %s301, 1
    %s303 = scalar_select %p300, %s301, %s302
    %p306 = pneg %p300
    %p307 = scmp.eq.s32.totalorder %s24, 3
    %p308 = por %p306, %p307
    %p309 = scmp.ne.s32.totalorder %s301, %s304
    %p310 = scmp.eq.s32.totalorder %s24, 0
    %p311 = por %p309, %p310
    %p312 = scmp.ne.s32.totalorder %s301, %s304
    %p313 = scmp.eq.s32.totalorder %s29, 3
    %p314 = por %p312, %p313
    %p315 = scmp.ne.s32.totalorder %s304, %s305
    %p316 = scmp.eq.s32.totalorder %s29, 0
    %p317 = por %p315, %p316
    %p318 = scmp.ne.s32.totalorder %s304, %s305
    %p319 = scmp.eq.s32.totalorder %s30, 3
    %p320 = por %p318, %p319
    %p322 = scmp.ne.s32.totalorder %s305, %s321
    %p323 = scmp.eq.s32.totalorder %s30, 0
    %p324 = por %p322, %p323
    %s325 = ssub.s32 %s32, %s39
    %p326 = scmp.eq.s32.totalorder %s325, 0
    %s328 = sadd.s32 %s327, 1
    %s329 = scalar_select %p326, %s327, %s328
    %p332 = pneg %p326
    %p333 = scmp.eq.s32.totalorder %s24, 3
    %p334 = por %p332, %p333
    %p335 = scmp.ne.s32.totalorder %s327, %s330
    %p336 = scmp.eq.s32.totalorder %s24, 0
    %p337 = por %p335, %p336
    %p338 = scmp.ne.s32.totalorder %s327, %s330
    %p339 = scmp.eq.s32.totalorder %s29, 3
    %p340 = por %p338, %p339
    %p341 = scmp.ne.s32.totalorder %s330, %s331
    %p342 = scmp.eq.s32.totalorder %s29, 0
    %p343 = por %p341, %p342
    %p344 = scmp.ne.s32.totalorder %s330, %s331
    %p345 = scmp.eq.s32.totalorder %s30, 3
    %p346 = por %p344, %p345
    %p348 = scmp.ne.s32.totalorder %s331, %s347
    %p349 = scmp.eq.s32.totalorder %s30, 0
    %p350 = por %p348, %p349
    %s351 = ssub.s32 %s32, %s39
    %p352 = scmp.eq.s32.totalorder %s351, 0
    %s354 = sadd.s32 %s353, 1
    %s355 = scalar_select %p352, %s353, %s354
    %p358 = pneg %p352
    %p359 = scmp.eq.s32.totalorder %s24, 3
    %p360 = por %p358, %p359
    %p361 = scmp.ne.s32.totalorder %s353, %s356
    %p362 = scmp.eq.s32.totalorder %s24, 0
    %p363 = por %p361, %p362
    %p364 = scmp.ne.s32.totalorder %s353, %s356
    %p365 = scmp.eq.s32.totalorder %s29, 3
    %p366 = por %p364, %p365
    %p367 = scmp.ne.s32.totalorder %s356, %s357
    %p368 = scmp.eq.s32.totalorder %s29, 0
    %p369 = por %p367, %p368
    %p370 = scmp.ne.s32.totalorder %s356, %s357
    %p371 = scmp.eq.s32.totalorder %s30, 3
    %p372 = por %p370, %p371
    %p374 = scmp.ne.s32.totalorder %s357, %s373
    %p375 = scmp.eq.s32.totalorder %s30, 0
    %p376 = por %p374, %p375
    %s377 = ssub.s32 %s32, %s39
    %p378 = scmp.eq.s32.totalorder %s377, 0
    %s380 = sadd.s32 %s379, 1
    %s381 = scalar_select %p378, %s379, %s380
    %p384 = pneg %p378
    %p385 = scmp.eq.s32.totalorder %s24, 3
    %p386 = por %p384, %p385
    %p387 = scmp.ne.s32.totalorder %s379, %s382
    %p388 = scmp.eq.s32.totalorder %s24, 0
    %p389 = por %p387, %p388
    %p390 = scmp.ne.s32.totalorder %s379, %s382
    %p391 = scmp.eq.s32.totalorder %s29, 3
    %p392 = por %p390, %p391
    %p393 = scmp.ne.s32.totalorder %s382, %s383
    %p394 = scmp.eq.s32.totalorder %s29, 0
    %p395 = por %p393, %p394
    %p396 = scmp.ne.s32.totalorder %s382, %s383
    %p397 = scmp.eq.s32.totalorder %s30, 3
    %p398 = por %p396, %p397
    %p400 = scmp.ne.s32.totalorder %s383, %s399
    %p401 = scmp.eq.s32.totalorder %s30, 0
    %p402 = por %p400, %p401
    %s403 = ssub.s32 %s32, %s39
    %p404 = scmp.eq.s32.totalorder %s403, 0
    %s406 = sadd.s32 %s405, 1
    %s407 = scalar_select %p404, %s405, %s406
    %p410 = pneg %p404
    %p411 = scmp.eq.s32.totalorder %s24, 3
    %p412 = por %p410, %p411
    %p413 = scmp.ne.s32.totalorder %s405, %s408
    %p414 = scmp.eq.s32.totalorder %s24, 0
    %p415 = por %p413, %p414
    %p416 = scmp.ne.s32.totalorder %s405, %s408
    %p417 = scmp.eq.s32.totalorder %s29, 3
    %p418 = por %p416, %p417
    %p419 = scmp.ne.s32.totalorder %s408, %s409
    %p420 = scmp.eq.s32.totalorder %s29, 0
    %p421 = por %p419, %p420
    %p422 = scmp.ne.s32.totalorder %s408, %s409
    %p423 = scmp.eq.s32.totalorder %s30, 3
    %p424 = por %p422, %p423
    %p426 = scmp.ne.s32.totalorder %s409, %s425
    %p427 = scmp.eq.s32.totalorder %s30, 0
    %p428 = por %p426, %p427
    %s429 = ssub.s32 %s32, %s39
    %p430 = scmp.eq.s32.totalorder %s429, 0
    %s432 = sadd.s32 %s431, 1
    %s433 = scalar_select %p430, %s431, %s432
    %p436 = pneg %p430
    %p437 = scmp.eq.s32.totalorder %s24, 3
    %p438 = por %p436, %p437
    %p439 = scmp.ne.s32.totalorder %s431, %s434
    %p440 = scmp.eq.s32.totalorder %s24, 0
    %p441 = por %p439, %p440
    %p442 = scmp.ne.s32.totalorder %s431, %s434
    %p443 = scmp.eq.s32.totalorder %s29, 3
    %p444 = por %p442, %p443
    %p445 = scmp.ne.s32.totalorder %s434, %s435
    %p446 = scmp.eq.s32.totalorder %s29, 0
    %p447 = por %p445, %p446
    %p448 = scmp.ne.s32.totalorder %s434, %s435
    %p449 = scmp.eq.s32.totalorder %s30, 3
    %p450 = por %p448, %p449
    %p452 = scmp.ne.s32.totalorder %s435, %s451
    %p453 = scmp.eq.s32.totalorder %s30, 0
    %p454 = por %p452, %p453
    %s455 = ssub.s32 %s32, %s39
    %p456 = scmp.eq.s32.totalorder %s455, 0
    %s458 = sadd.s32 %s457, 1
    %s459 = scalar_select %p456, %s457, %s458
    %p462 = pneg %p456
    %p463 = scmp.eq.s32.totalorder %s24, 3
    %p464 = por %p462, %p463
    %p465 = scmp.ne.s32.totalorder %s457, %s460
    %p466 = scmp.eq.s32.totalorder %s24, 0
    %p467 = por %p465, %p466
    %p468 = scmp.ne.s32.totalorder %s457, %s460
    %p469 = scmp.eq.s32.totalorder %s29, 3
    %p470 = por %p468, %p469
    %p471 = scmp.ne.s32.totalorder %s460, %s461
    %p472 = scmp.eq.s32.totalorder %s29, 0
    %p473 = por %p471, %p472
    %p474 = scmp.ne.s32.totalorder %s460, %s461
    %p475 = scmp.eq.s32.totalorder %s30, 3
    %p476 = por %p474, %p475
    %p478 = scmp.ne.s32.totalorder %s461, %s477
    %p479 = scmp.eq.s32.totalorder %s30, 0
    %p480 = por %p478, %p479
    %s481 = ssub.s32 %s32, %s39
    %p482 = scmp.eq.s32.totalorder %s481, 0
    %s484 = sadd.s32 %s483, 1
    %s485 = scalar_select %p482, %s483, %s484
    %p488 = pneg %p482
    %p489 = scmp.eq.s32.totalorder %s24, 3
    %p490 = por %p488, %p489
    %p491 = scmp.ne.s32.totalorder %s483, %s486
    %p492 = scmp.eq.s32.totalorder %s24, 0
    %p493 = por %p491, %p492
    %p494 = scmp.ne.s32.totalorder %s483, %s486
    %p495 = scmp.eq.s32.totalorder %s29, 3
    %p496 = por %p494, %p495
    %p497 = scmp.ne.s32.totalorder %s486, %s487
    %p498 = scmp.eq.s32.totalorder %s29, 0
    %p499 = por %p497, %p498
    %p500 = scmp.ne.s32.totalorder %s486, %s487
    %p501 = scmp.eq.s32.totalorder %s30, 3
    %p502 = por %p500, %p501
    %p504 = scmp.ne.s32.totalorder %s487, %s503
    %p505 = scmp.eq.s32.totalorder %s30, 0
    %p506 = por %p504, %p505
    %s507 = ssub.s32 %s31, %s43
    %p508 = scmp.eq.s32.totalorder %s507, 0
    %s510 = sadd.s32 %s509, 1
    %s511 = scalar_select %p508, %s509, %s510
    %p514 = pneg %p508
    %p515 = scmp.eq.s32.totalorder %s24, 3
    %p516 = por %p514, %p515
    %p517 = scmp.ne.s32.totalorder %s509, %s512
    %p518 = scmp.eq.s32.totalorder %s24, 0
    %p519 = por %p517, %p518
    %p520 = scmp.ne.s32.totalorder %s509, %s512
    %p521 = scmp.eq.s32.totalorder %s29, 3
    %p522 = por %p520, %p521
    %p523 = scmp.ne.s32.totalorder %s512, %s513
    %p524 = scmp.eq.s32.totalorder %s29, 0
    %p525 = por %p523, %p524
    %p526 = scmp.ne.s32.totalorder %s512, %s513
    %p527 = scmp.eq.s32.totalorder %s30, 3
    %p528 = por %p526, %p527
    %p530 = scmp.ne.s32.totalorder %s513, %s529
    %p531 = scmp.eq.s32.totalorder %s30, 0
    %p532 = por %p530, %p531
    %p533 = scmp.le.s32.totalorder 1, %s24
    %p534 = scmp.lt.s32.totalorder %s24, 5
    %p535 = pnand %p533, %p534
    %p536 = pneg %p535
    // Predicated region
    $region9: #{transformer_forward.1} parent=5 // pred_check
      _
    $region10: #{transformer_forward.1} parent=5 // pred_check_branch
      %538 = sbr.rel (%p535) target = $region12
    $region11: #{transformer_forward.1} parent=5 // pred_region
      %s539 = ssub.s32 %s24, 1
      // Predicated region
      $region13: #{transformer_forward.1} parent=11 // pred_check
        %p540 = pneg %p83
      $region14: #{transformer_forward.1} parent=11 // pred_check_branch
        %542 = sbr.rel (%p540) target = $region16
      $region15: #{transformer_forward.1} parent=11 // pred_region
        _
      $region16: #{transformer_forward.1} parent=11 // pred_fallthru
        _
    $region12: #{transformer_forward.1} parent=5 // pred_fallthru
      _
    %p543 = scmp.lt.s32.totalorder %s24, 4
    // Predicated region
    $region17: #{transformer_forward.1} parent=5 // pred_check
      %p544 = pneg %p543
    $region18: #{transformer_forward.1} parent=5 // pred_check_branch
      %546 = sbr.rel (%p544) target = $region20
    $region19: #{transformer_forward.1} parent=5 // pred_region
      // Predicated region
      $region21: #{transformer_forward.1} parent=19 // pred_check
        %p547 = pneg %p56
      $region22: #{transformer_forward.1} parent=19 // pred_check_branch
        %549 = sbr.rel (%p547) target = $region24
      $region23: #{transformer_forward.1} parent=19 // pred_region
        %p550 = scmp.lt.s32.totalorder %s31, 1
        %s551 = scalar_select %p550, %s31, 1
        %s552 = smul.addr %s551, 8
        %s553 = scalar_lea.vmem %s0, %s552
      $region24: #{transformer_forward.1} parent=19 // pred_fallthru
        _
      // Predicated region
      $region25: #{transformer_forward.1} parent=19 // pred_check
        %p554 = pneg %p103
      $region26: #{transformer_forward.1} parent=19 // pred_check_branch
        %556 = sbr.rel (%p554) target = $region28
      $region27: #{transformer_forward.1} parent=19 // pred_region
        %p557 = scmp.lt.s32.totalorder %s32, 1
        %s558 = scalar_select %p557, %s32, 1
        %s559 = smul.addr %s558, 4
        %s560 = smul.addr %s559, 8
        %s561 = scalar_lea.vmem %s2, %s560
      $region28: #{transformer_forward.1} parent=19 // pred_fallthru
        _
      // Predicated region
      $region29: #{transformer_forward.1} parent=19 // pred_check
        %p562 = pneg %p129
      $region30: #{transformer_forward.1} parent=19 // pred_check_branch
        %564 = sbr.rel (%p562) target = $region32
      $region31: #{transformer_forward.1} parent=19 // pred_region
        %p565 = scmp.lt.s32.totalorder %s32, 1
        %s566 = scalar_select %p565, %s32, 1
        %s567 = scalar_lea.vmem %s3, %s566
      $region32: #{transformer_forward.1} parent=19 // pred_fallthru
        _
      // Predicated region
      $region33: #{transformer_forward.1} parent=19 // pred_check
        %p568 = pneg %p155
      $region34: #{transformer_forward.1} parent=19 // pred_check_branch
        %570 = sbr.rel (%p568) target = $region36
      $region35: #{transformer_forward.1} parent=19 // pred_region
        %p571 = scmp.lt.s32.totalorder %s32, 1
        %s572 = scalar_select %p571, %s32, 1
        %s573 = smul.addr %s572, 4
        %s574 = smul.addr %s573, 8
        %s575 = scalar_lea.vmem %s4, %s574
      $region36: #{transformer_forward.1} parent=19 // pred_fallthru
        _
      // Predicated region
      $region37: #{transformer_forward.1} parent=19 // pred_check
        %p576 = pneg %p181
      $region38: #{transformer_forward.1} parent=19 // pred_check_branch
        %578 = sbr.rel (%p576) target = $region40
      $region39: #{transformer_forward.1} parent=19 // pred_region
        %p579 = scmp.lt.s32.totalorder %s32, 1
        %s580 = scalar_select %p579, %s32, 1
        %s581 = scalar_lea.vmem %s5, %s580
      $region40: #{transformer_forward.1} parent=19 // pred_fallthru
        _
      // Predicated region
      $region41: #{transformer_forward.1} parent=19 // pred_check
        %p582 = pneg %p207
      $region42: #{transformer_forward.1} parent=19 // pred_check_branch
        %584 = sbr.rel (%p582) target = $region44
      $region43: #{transformer_forward.1} parent=19 // pred_region
        %p585 = scmp.lt.s32.totalorder %s32, 1
        %s586 = scalar_select %p585, %s32, 1
        %s587 = smul.addr %s586, 4
        %s588 = smul.addr %s587, 8
        %s589 = scalar_lea.vmem %s6, %s588
      $region44: #{transformer_forward.1} parent=19 // pred_fallthru
        _
      // Predicated region
      $region45: #{transformer_forward.1} parent=19 // pred_check
        %p590 = pneg %p233
      $region46: #{transformer_forward.1} parent=19 // pred_check_branch
        %592 = sbr.rel (%p590) target = $region48
      $region47: #{transformer_forward.1} parent=19 // pred_region
        %p593 = scmp.lt.s32.totalorder %s32, 1
        %s594 = scalar_select %p593, %s32, 1
        %s595 = scalar_lea.vmem %s7, %s594
      $region48: #{transformer_forward.1} parent=19 // pred_fallthru
        _
      // Predicated region
      $region49: #{transformer_forward.1} parent=19 // pred_check
        %p596 = pneg %p259
      $region50: #{transformer_forward.1} parent=19 // pred_check_branch
        %598 = sbr.rel (%p596) target = $region52
      $region51: #{transformer_forward.1} parent=19 // pred_region
        %p599 = scmp.lt.s32.totalorder %s32, 1
        %s600 = scalar_select %p599, %s32, 1
        %s601 = smul.addr %s600, 4
        %s602 = smul.addr %s601, 8
        %s603 = scalar_lea.vmem %s8, %s602
      $region52: #{transformer_forward.1} parent=19 // pred_fallthru
        _
      // Predicated region
      $region53: #{transformer_forward.1} parent=19 // pred_check
        %p604 = pneg %p285
      $region54: #{transformer_forward.1} parent=19 // pred_check_branch
        %606 = sbr.rel (%p604) target = $region56
      $region55: #{transformer_forward.1} parent=19 // pred_region
        %p607 = scmp.lt.s32.totalorder %s32, 1
        %s608 = scalar_select %p607, %s32, 1
        %s609 = scalar_lea.vmem %s9, %s608
      $region56: #{transformer_forward.1} parent=19 // pred_fallthru
        _
      // Predicated region
      $region57: #{transformer_forward.1} parent=19 // pred_check
        %p610 = pneg %p311
      $region58: #{transformer_forward.1} parent=19 // pred_check_branch
        %612 = sbr.rel (%p610) target = $region60
      $region59: #{transformer_forward.1} parent=19 // pred_region
        %p613 = scmp.lt.s32.totalorder %s32, 1
        %s614 = scalar_select %p613, %s32, 1
        %s615 = scalar_lea.vmem %s10, %s614
      $region60: #{transformer_forward.1} parent=19 // pred_fallthru
        _
      // Predicated region
      $region61: #{transformer_forward.1} parent=19 // pred_check
        %p616 = pneg %p337
      $region62: #{transformer_forward.1} parent=19 // pred_check_branch
        %618 = sbr.rel (%p616) target = $region64
      $region63: #{transformer_forward.1} parent=19 // pred_region
        %p619 = scmp.lt.s32.totalorder %s32, 1
        %s620 = scalar_select %p619, %s32, 1
        %s621 = scalar_lea.vmem %s11, %s620
      $region64: #{transformer_forward.1} parent=19 // pred_fallthru
        _
      // Predicated region
      $region65: #{transformer_forward.1} parent=19 // pred_check
        %p622 = pneg %p363
      $region66: #{transformer_forward.1} parent=19 // pred_check_branch
        %624 = sbr.rel (%p622) target = $region68
      $region67: #{transformer_forward.1} parent=19 // pred_region
        %p625 = scmp.lt.s32.totalorder %s32, 1
        %s626 = scalar_select %p625, %s32, 1
        %s627 = smul.addr %s626, 4
        %s628 = smul.addr %s627, 8
        %s629 = scalar_lea.vmem %s12, %s628
      $region68: #{transformer_forward.1} parent=19 // pred_fallthru
        _
      // Predicated region
      $region69: #{transformer_forward.1} parent=19 // pred_check
        %p630 = pneg %p389
      $region70: #{transformer_forward.1} parent=19 // pred_check_branch
        %632 = sbr.rel (%p630) target = $region72
      $region71: #{transformer_forward.1} parent=19 // pred_region
        %p633 = scmp.lt.s32.totalorder %s32, 1
        %s634 = scalar_select %p633, %s32, 1
        %s635 = scalar_lea.vmem %s13, %s634
      $region72: #{transformer_forward.1} parent=19 // pred_fallthru
        _
      // Predicated region
      $region73: #{transformer_forward.1} parent=19 // pred_check
        %p636 = pneg %p415
      $region74: #{transformer_forward.1} parent=19 // pred_check_branch
        %638 = sbr.rel (%p636) target = $region76
      $region75: #{transformer_forward.1} parent=19 // pred_region
        %p639 = scmp.lt.s32.totalorder %s32, 1
        %s640 = scalar_select %p639, %s32, 1
        %s641 = smul.addr %s640, 8
        %s642 = smul.addr %s641, 8
        %s643 = scalar_lea.vmem %s14, %s642
      $region76: #{transformer_forward.1} parent=19 // pred_fallthru
        _
      // Predicated region
      $region77: #{transformer_forward.1} parent=19 // pred_check
        %p644 = pneg %p441
      $region78: #{transformer_forward.1} parent=19 // pred_check_branch
        %646 = sbr.rel (%p644) target = $region80
      $region79: #{transformer_forward.1} parent=19 // pred_region
        %p647 = scmp.lt.s32.totalorder %s32, 1
        %s648 = scalar_select %p647, %s32, 1
        %s649 = scalar_lea.vmem %s15, %s648
      $region80: #{transformer_forward.1} parent=19 // pred_fallthru
        _
      // Predicated region
      $region81: #{transformer_forward.1} parent=19 // pred_check
        %p650 = pneg %p467
      $region82: #{transformer_forward.1} parent=19 // pred_check_branch
        %652 = sbr.rel (%p650) target = $region84
      $region83: #{transformer_forward.1} parent=19 // pred_region
        %p653 = scmp.lt.s32.totalorder %s32, 1
        %s654 = scalar_select %p653, %s32, 1
        %s655 = scalar_lea.vmem %s16, %s654
      $region84: #{transformer_forward.1} parent=19 // pred_fallthru
        _
      // Predicated region
      $region85: #{transformer_forward.1} parent=19 // pred_check
        %p656 = pneg %p493
      $region86: #{transformer_forward.1} parent=19 // pred_check_branch
        %658 = sbr.rel (%p656) target = $region88
      $region87: #{transformer_forward.1} parent=19 // pred_region
        %p659 = scmp.lt.s32.totalorder %s32, 1
        %s660 = scalar_select %p659, %s32, 1
        %s661 = scalar_lea.vmem %s17, %s660
      $region88: #{transformer_forward.1} parent=19 // pred_fallthru
        _
    $region20: #{transformer_forward.1} parent=5 // pred_fallthru
      _
    %p662 = scmp.le.s32.totalorder 1, %s24
    %p663 = scmp.lt.s32.totalorder %s24, 5
    %p664 = pnand %p662, %p663
    %p665 = pneg %p664
    // Predicated region
    $region89: #{transformer_forward.1} parent=5 // pred_check
      _
    $region90: #{transformer_forward.1} parent=5 // pred_check_branch
      %667 = sbr.rel (%p664) target = $region92
    $region91: #{transformer_forward.1} parent=5 // pred_region
      %s668 = ssub.s32 %s24, 1
      %p669 = scmp.lt.s32.totalorder %s33, 1
      %s670 = scalar_select %p669, %s33, 1
      %s671 = smul.addr %s670, 8
      %s672 = scalar_lea.vmem %s0, %s671
      %p673 = pneg %p62
      %p674 = pneg %p59
      %p675 = pneg %p83
      %p676 = pneg %p80
      %p677 = scmp.lt.s32.totalorder %s34, 1
      %s678 = scalar_select %p677, %s34, 1
      %s679 = smul.addr %s678, 4
      %s680 = smul.addr %s679, 8
      %s681 = scalar_lea.vmem %s2, %s680
      %p682 = pneg %p109
      %p683 = pneg %p106
      %p684 = scmp.lt.s32.totalorder %s34, 1
      %s685 = scalar_select %p684, %s34, 1
      %s686 = scalar_lea.vmem %s3, %s685
      %p687 = pneg %p135
      %p688 = pneg %p132
      %p689 = scmp.lt.s32.totalorder %s34, 1
      %s690 = scalar_select %p689, %s34, 1
      %s691 = smul.addr %s690, 4
      %s692 = smul.addr %s691, 8
      %s693 = scalar_lea.vmem %s4, %s692
      %p694 = pneg %p161
      %p695 = pneg %p158
      %p696 = scmp.lt.s32.totalorder %s34, 1
      %s697 = scalar_select %p696, %s34, 1
      %s698 = scalar_lea.vmem %s5, %s697
      %p699 = pneg %p187
      %p700 = pneg %p184
      %p701 = scmp.lt.s32.totalorder %s34, 1
      %s702 = scalar_select %p701, %s34, 1
      %s703 = smul.addr %s702, 4
      %s704 = smul.addr %s703, 8
      %s705 = scalar_lea.vmem %s6, %s704
      %p706 = pneg %p213
      %p707 = pneg %p210
      %p708 = scmp.lt.s32.totalorder %s34, 1
      %s709 = scalar_select %p708, %s34, 1
      %s710 = scalar_lea.vmem %s7, %s709
      %p711 = pneg %p239
      %p712 = pneg %p236
      %p713 = scmp.lt.s32.totalorder %s34, 1
      %s714 = scalar_select %p713, %s34, 1
      %s715 = smul.addr %s714, 4
      %s716 = smul.addr %s715, 8
      %s717 = scalar_lea.vmem %s8, %s716
      %p718 = pneg %p265
      %p719 = pneg %p262
      %p720 = scmp.lt.s32.totalorder %s34, 1
      %s721 = scalar_select %p720, %s34, 1
      %s722 = scalar_lea.vmem %s9, %s721
      %p723 = pneg %p291
      %p724 = pneg %p288
      %p725 = scmp.lt.s32.totalorder %s34, 1
      %s726 = scalar_select %p725, %s34, 1
      %s727 = scalar_lea.vmem %s10, %s726
      %p728 = pneg %p317
      %p729 = pneg %p314
      %p730 = scmp.lt.s32.totalorder %s34, 1
      %s731 = scalar_select %p730, %s34, 1
      %s732 = scalar_lea.vmem %s11, %s731
      %p733 = pneg %p343
      %p734 = pneg %p340
      %p735 = scmp.lt.s32.totalorder %s34, 1
      %s736 = scalar_select %p735, %s34, 1
      %s737 = smul.addr %s736, 4
      %s738 = smul.addr %s737, 8
      %s739 = scalar_lea.vmem %s12, %s738
      %p740 = pneg %p369
      %p741 = pneg %p366
      %p742 = scmp.lt.s32.totalorder %s34, 1
      %s743 = scalar_select %p742, %s34, 1
      %s744 = scalar_lea.vmem %s13, %s743
      %p745 = pneg %p395
      %p746 = pneg %p392
      %p747 = scmp.lt.s32.totalorder %s34, 1
      %s748 = scalar_select %p747, %s34, 1
      %s749 = smul.addr %s748, 8
      %s750 = smul.addr %s749, 8
      %s751 = scalar_lea.vmem %s14, %s750
      %p752 = pneg %p421
      %p753 = pneg %p418
      %p754 = scmp.lt.s32.totalorder %s34, 1
      %s755 = scalar_select %p754, %s34, 1
      %s756 = scalar_lea.vmem %s15, %s755
      %p757 = pneg %p447
      %p758 = pneg %p444
      %p759 = scmp.lt.s32.totalorder %s34, 1
      %s760 = scalar_select %p759, %s34, 1
      %s761 = scalar_lea.vmem %s16, %s760
      %p762 = pneg %p473
      %p763 = pneg %p470
      %p764 = scmp.lt.s32.totalorder %s34, 1
      %s765 = scalar_select %p764, %s34, 1
      %s766 = scalar_lea.vmem %s17, %s765
      %p767 = pneg %p499
      %p768 = pneg %p496
      %p769 = pneg %p525
      %p770 = pneg %p522
      %p771 = scmp.lt.s32.totalorder %s33, 1
      %s772 = scalar_select %p771, %s33, 1
      %s773 = smul.addr %s772, 8
      %s774 = scalar_lea.vmem %s18, %s773
      %p775 = scmp.lt.s32.totalorder %s33, 1
      %s776 = scalar_select %p775, %s33, 1
      %s777 = smul.addr %s776, 8
      %s778 = scalar_lea.vmem %s0, %s777
      %p779 = scmp.lt.s32.totalorder %s34, 1
      %s780 = scalar_select %p779, %s34, 1
      %s781 = smul.addr %s780, 4
      %s782 = smul.addr %s781, 8
      %s783 = scalar_lea.vmem %s2, %s782
      %p784 = scmp.lt.s32.totalorder %s34, 1
      %s785 = scalar_select %p784, %s34, 1
      %s786 = scalar_lea.vmem %s3, %s785
      %p787 = scmp.lt.s32.totalorder %s34, 1
      %s788 = scalar_select %p787, %s34, 1
      %s789 = smul.addr %s788, 4
      %s790 = smul.addr %s789, 8
      %s791 = scalar_lea.vmem %s4, %s790
      %p792 = scmp.lt.s32.totalorder %s34, 1
      %s793 = scalar_select %p792, %s34, 1
      %s794 = scalar_lea.vmem %s5, %s793
      %p795 = scmp.lt.s32.totalorder %s34, 1
      %s796 = scalar_select %p795, %s34, 1
      %s797 = smul.addr %s796, 4
      %s798 = smul.addr %s797, 8
      %s799 = scalar_lea.vmem %s6, %s798
      %p800 = scmp.lt.s32.totalorder %s34, 1
      %s801 = scalar_select %p800, %s34, 1
      %s802 = scalar_lea.vmem %s7, %s801
      %p803 = scmp.lt.s32.totalorder %s34, 1
      %s804 = scalar_select %p803, %s34, 1
      %s805 = smul.addr %s804, 4
      %s806 = smul.addr %s805, 8
      %s807 = scalar_lea.vmem %s8, %s806
      %p808 = scmp.lt.s32.totalorder %s34, 1
      %s809 = scalar_select %p808, %s34, 1
      %s810 = scalar_lea.vmem %s9, %s809
      %p811 = scmp.lt.s32.totalorder %s34, 1
      %s812 = scalar_select %p811, %s34, 1
      %s813 = scalar_lea.vmem %s10, %s812
      %p814 = scmp.lt.s32.totalorder %s34, 1
      %s815 = scalar_select %p814, %s34, 1
      %s816 = scalar_lea.vmem %s11, %s815
      %p817 = scmp.lt.s32.totalorder %s34, 1
      %s818 = scalar_select %p817, %s34, 1
      %s819 = smul.addr %s818, 4
      %s820 = smul.addr %s819, 8
      %s821 = scalar_lea.vmem %s12, %s820
      %p822 = scmp.lt.s32.totalorder %s34, 1
      %s823 = scalar_select %p822, %s34, 1
      %s824 = scalar_lea.vmem %s13, %s823
      %p825 = scmp.lt.s32.totalorder %s34, 1
      %s826 = scalar_select %p825, %s34, 1
      %s827 = smul.addr %s826, 8
      %s828 = smul.addr %s827, 8
      %s829 = scalar_lea.vmem %s14, %s828
      %p830 = scmp.lt.s32.totalorder %s34, 1
      %s831 = scalar_select %p830, %s34, 1
      %s832 = scalar_lea.vmem %s15, %s831
      %p833 = scmp.lt.s32.totalorder %s34, 1
      %s834 = scalar_select %p833, %s34, 1
      %s835 = scalar_lea.vmem %s16, %s834
      %p836 = scmp.lt.s32.totalorder %s34, 1
      %s837 = scalar_select %p836, %s34, 1
      %s838 = scalar_lea.vmem %s17, %s837
      %p839 = scmp.lt.s32.totalorder %s33, 1
      %s840 = scalar_select %p839, %s33, 1
      %s841 = smul.addr %s840, 8
      %s842 = scalar_lea.vmem %s18, %s841
      %p844 = scmp.eq.s32.totalorder %s34, 0
      // Predicated region
      $region93: #{transformer_forward.1} parent=91 // pred_check
        %p845 = pneg %p844
      $region94: #{transformer_forward.1} parent=91 // pred_check_branch
        %847 = sbr.rel (%p845) target = $region96
      $region95: #{transformer_forward.1} parent=91 // pred_region
        %v848 = vld [vmem:[%s778] sm:$0xff]
        %v849 = vmul.f32 %v848, 5.656854
        %v850 = vld [vmem:[%s1] sm:$0xff]
        %v851 = vadd.f32 %v849, %v850
        %vm852 = vcmask 261120
        %853 = vst.msk [vmem:[#allocation2] sm:$0xff] %vm852, %v851
      $region96: #{transformer_forward.1} parent=91 // pred_fallthru
        _
      %v854 = vld [vmem:[#allocation2] sm:$0xff]
      %v855 = vpack.c.bf16 %v854, %v854
      %v856 = vld [vmem:[%s783] sm:$0xff]
      %v857 = vld [vmem:[%s783 + $0x8] sm:$0xff]
      %v858 = vld [vmem:[%s783 + $0x10] sm:$0xff]
      %v859 = vld [vmem:[%s783 + $0x18] sm:$0xff]
      %v860 = vpack.c.bf16 %v857, %v856
      %v861 = vpack.c.bf16 %v859, %v858
      %v862 = vld [vmem:[%s786] sm:$0x1]
      %v864 = vperm.slane %v862, 0
      %vm866 = vcmask 261120
      %v868 = vsel %vm866, %v855, 0
      %870 = vmatpush.bf16.msra.mxu0 0
      %871 = vmatpush.bf16.msra.mxu0 0
      %872 = vmatpush.bf16.msra.mxu0 0
      %873 = vmatpush.bf16.msra.mxu0 0
      %874 = vmatpush.bf16.msra.mxu0 0
      %875 = vmatpush.bf16.msra.mxu0 0
      %876 = vmatpush.bf16.msra.mxu0 %v861
      %877 = vmatpush.bf16.msra.mxu0 %v860
      %878 = vmatmul.bf16.gmra.mxu0 %v868
      %v879 = vpop.f32.mrf.mxu0
      %v880 = vadd.f32 %v864, %v879
      %v881 = vpop.f32.mrf.mxu0
      %882 = vdwg.mxu0
      %v883 = vld [vmem:[%s791] sm:$0xff]
      %v884 = vld [vmem:[%s791 + $0x8] sm:$0xff]
      %v885 = vld [vmem:[%s791 + $0x10] sm:$0xff]
      %v886 = vld [vmem:[%s791 + $0x18] sm:$0xff]
      %v887 = vpack.c.bf16 %v884, %v883
      %v888 = vpack.c.bf16 %v886, %v885
      %v889 = vld [vmem:[%s794] sm:$0x1]
      %v891 = vperm.slane %v889, 0
      %893 = vmatpush.bf16.msra.mxu0 0
      %894 = vmatpush.bf16.msra.mxu0 0
      %895 = vmatpush.bf16.msra.mxu0 0
      %896 = vmatpush.bf16.msra.mxu0 0
      %897 = vmatpush.bf16.msra.mxu0 0
      %898 = vmatpush.bf16.msra.mxu0 0
      %899 = vmatpush.bf16.msra.mxu0 %v888
      %900 = vmatpush.bf16.msra.mxu0 %v887
      %901 = vmatmul.bf16.gmra.mxu0 %v868
      %v902 = vpop.f32.mrf.mxu0
      %v903 = vadd.f32 %v891, %v902
      %v904 = vpop.f32.mrf.mxu0
      %905 = vdwg.mxu0
      %v906 = vld [vmem:[%s799] sm:$0xff]
      %v907 = vld [vmem:[%s799 + $0x8] sm:$0xff]
      %v908 = vld [vmem:[%s799 + $0x10] sm:$0xff]
      %v909 = vld [vmem:[%s799 + $0x18] sm:$0xff]
      %v910 = vpack.c.bf16 %v907, %v906
      %v911 = vpack.c.bf16 %v909, %v908
      %v912 = vld [vmem:[%s802] sm:$0x1]
      %v914 = vperm.slane %v912, 0
      %916 = vmatpush.bf16.msra.mxu0 0
      %917 = vmatpush.bf16.msra.mxu0 0
      %918 = vmatpush.bf16.msra.mxu0 0
      %919 = vmatpush.bf16.msra.mxu0 0
      %920 = vmatpush.bf16.msra.mxu0 0
      %921 = vmatpush.bf16.msra.mxu0 0
      %922 = vmatpush.bf16.msra.mxu0 %v911
      %923 = vmatpush.bf16.msra.mxu0 %v910
      %924 = vmatmul.bf16.gmra.mxu0 %v868
      %v925 = vpop.f32.mrf.mxu0
      %v926 = vadd.f32 %v914, %v925
      %v927 = vpop.f32.mrf.mxu0
      %928 = vdwg.mxu0
      %930 = vrot.lane.b32.xlu0 %v880, 120
      %v931 = vpop.permute.xlu0 %930
      %933 = vrot.lane.b32.xlu0 %v880, 112
      %v934 = vpop.permute.xlu0 %933
      %936 = vrot.lane.b32.xlu0 %v880, 104
      %v937 = vpop.permute.xlu0 %936
      %v939 = vrot.slane %v934, 4
      %vm940 = vcmask 1047556
      %v941 = vsel %vm940, %v939, %v880
      %v942 = vrot.slane %v880, 4
      %v943 = vsel %vm940, %v934, %v942
      %v945 = vunpack.c.l.s4 1983009808
      %v946 = vunpack.c.0.s8 %v945
      %v947 = vperm.slane %v941, %v946
      %v949 = vunpack.c.l.s4 1983009808
      %v950 = vunpack.c.0.s8 %v949
      %v951 = vperm.slane %v943, %v950
      %v952 = vrot.slane %v937, 4
      %v953 = vsel %vm940, %v952, %v931
      %v954 = vrot.slane %v931, 4
      %v955 = vsel %vm940, %v937, %v954
      %v957 = vunpack.c.l.s4 1983009808
      %v958 = vunpack.c.0.s8 %v957
      %v959 = vperm.slane %v953, %v958
      %v961 = vunpack.c.l.s4 1983009808
      %v962 = vunpack.c.0.s8 %v961
      %v963 = vperm.slane %v955, %v962
      %v964 = vrot.slane %v959, 4
      %v965 = vsel %vm940, %v964, %v947
      %v966 = vrot.slane %v947, 4
      %v967 = vsel %vm940, %v959, %v966
      %v969 = vunpack.c.l.s4 1934713408
      %v970 = vunpack.c.0.s8 %v969
      %v971 = vperm.slane %v965, %v970
      %v973 = vunpack.c.l.s4 1934713408
      %v974 = vunpack.c.0.s8 %v973
      %v975 = vperm.slane %v967, %v974
      %v976 = vrot.slane %v963, 4
      %v977 = vsel %vm940, %v976, %v951
      %v978 = vrot.slane %v951, 4
      %v979 = vsel %vm940, %v963, %v978
      %v981 = vunpack.c.l.s4 1934713408
      %v982 = vunpack.c.0.s8 %v981
      %v983 = vperm.slane %v977, %v982
      %v985 = vunpack.c.l.s4 1934713408
      %v986 = vunpack.c.0.s8 %v985
      %v987 = vperm.slane %v979, %v986
      %v988 = vrot.slane %v971, 4
      %v989 = vsel %vm940, 0.0, %v988
      %v990 = vrot.slane %v975, 4
      %v991 = vsel %vm940, 0.0, %v990
      %v992 = vrot.slane %v983, 4
      %v993 = vsel %vm940, 0.0, %v992
      %v994 = vrot.slane %v987, 4
      %v995 = vsel %vm940, 0.0, %v994
      %v996 = vsel %vm940, %v990, %v971
      %v998 = vunpack.c.l.s4 1983009808
      %v999 = vunpack.c.0.s8 %v998
      %v1000 = vperm.slane %v996, %v999
      %v1001 = vrot.slane %v991, 4
      %v1002 = vsel %vm940, %v1001, %v989
      %v1004 = vunpack.c.l.s4 1983009808
      %v1005 = vunpack.c.0.s8 %v1004
      %v1006 = vperm.slane %v1002, %v1005
      %v1007 = vsel %vm940, %v994, %v983
      %v1009 = vunpack.c.l.s4 1983009808
      %v1010 = vunpack.c.0.s8 %v1009
      %v1011 = vperm.slane %v1007, %v1010
      %v1012 = vrot.slane %v995, 4
      %v1013 = vsel %vm940, %v1012, %v993
      %v1015 = vunpack.c.l.s4 1983009808
      %v1016 = vunpack.c.0.s8 %v1015
      %v1017 = vperm.slane %v1013, %v1016
      %v1018 = vrot.slane %v1006, 4
      %v1019 = vsel %vm940, %v1018, %v1000
      %v1020 = vrot.slane %v1000, 4
      %v1021 = vsel %vm940, %v1006, %v1020
      %v1023 = vunpack.c.l.s4 1934713408
      %v1024 = vunpack.c.0.s8 %v1023
      %v1025 = vperm.slane %v1019, %v1024
      %v1027 = vunpack.c.l.s4 1934713408
      %v1028 = vunpack.c.0.s8 %v1027
      %v1029 = vperm.slane %v1021, %v1028
      %v1030 = vrot.slane %v1017, 4
      %v1031 = vsel %vm940, %v1030, %v1011
      %v1032 = vrot.slane %v1011, 4
      %v1033 = vsel %vm940, %v1017, %v1032
      %v1035 = vunpack.c.l.s4 1934713408
      %v1036 = vunpack.c.0.s8 %v1035
      %v1037 = vperm.slane %v1031, %v1036
      %v1039 = vunpack.c.l.s4 1934713408
      %v1040 = vunpack.c.0.s8 %v1039
      %v1041 = vperm.slane %v1033, %v1040
      %v1042 = vrot.slane %v1037, 4
      %v1043 = vsel %vm940, %v1042, %v1025
      %v1044 = vrot.slane %v1025, 4
      %v1045 = vsel %vm940, %v1037, %v1044
      %v1046 = vrot.slane %v1041, 4
      %v1047 = vsel %vm940, %v1046, %v1029
      %v1048 = vrot.slane %v1029, 4
      %v1049 = vsel %vm940, %v1041, %v1048
      %1051 = vrot.lane.b32.xlu0 %v903, 120
      %v1052 = vpop.permute.xlu0 %1051
      %1054 = vrot.lane.b32.xlu0 %v903, 112
      %v1055 = vpop.permute.xlu0 %1054
      %1057 = vrot.lane.b32.xlu0 %v903, 104
      %v1058 = vpop.permute.xlu0 %1057
      %v1060 = vrot.slane %v1055, 4
      %v1061 = vsel %vm940, %v1060, %v903
      %v1062 = vrot.slane %v903, 4
      %v1063 = vsel %vm940, %v1055, %v1062
      %v1065 = vunpack.c.l.s4 1983009808
      %v1066 = vunpack.c.0.s8 %v1065
      %v1067 = vperm.slane %v1061, %v1066
      %v1069 = vunpack.c.l.s4 1983009808
      %v1070 = vunpack.c.0.s8 %v1069
      %v1071 = vperm.slane %v1063, %v1070
      %v1072 = vrot.slane %v1058, 4
      %v1073 = vsel %vm940, %v1072, %v1052
      %v1074 = vrot.slane %v1052, 4
      %v1075 = vsel %vm940, %v1058, %v1074
      %v1077 = vunpack.c.l.s4 1983009808
      %v1078 = vunpack.c.0.s8 %v1077
      %v1079 = vperm.slane %v1073, %v1078
      %v1081 = vunpack.c.l.s4 1983009808
      %v1082 = vunpack.c.0.s8 %v1081
      %v1083 = vperm.slane %v1075, %v1082
      %v1084 = vrot.slane %v1079, 4
      %v1085 = vsel %vm940, %v1084, %v1067
      %v1086 = vrot.slane %v1067, 4
      %v1087 = vsel %vm940, %v1079, %v1086
      %v1089 = vunpack.c.l.s4 1934713408
      %v1090 = vunpack.c.0.s8 %v1089
      %v1091 = vperm.slane %v1085, %v1090
      %v1093 = vunpack.c.l.s4 1934713408
      %v1094 = vunpack.c.0.s8 %v1093
      %v1095 = vperm.slane %v1087, %v1094
      %v1096 = vrot.slane %v1083, 4
      %v1097 = vsel %vm940, %v1096, %v1071
      %v1098 = vrot.slane %v1071, 4
      %v1099 = vsel %vm940, %v1083, %v1098
      %v1101 = vunpack.c.l.s4 1934713408
      %v1102 = vunpack.c.0.s8 %v1101
      %v1103 = vperm.slane %v1097, %v1102
      %v1105 = vunpack.c.l.s4 1934713408
      %v1106 = vunpack.c.0.s8 %v1105
      %v1107 = vperm.slane %v1099, %v1106
      %v1108 = vrot.slane %v1091, 4
      %v1109 = vsel %vm940, 0.0, %v1108
      %v1110 = vrot.slane %v1095, 4
      %v1111 = vsel %vm940, 0.0, %v1110
      %v1112 = vrot.slane %v1103, 4
      %v1113 = vsel %vm940, 0.0, %v1112
      %v1114 = vrot.slane %v1107, 4
      %v1115 = vsel %vm940, 0.0, %v1114
      %v1116 = vsel %vm940, %v1110, %v1091
      %v1118 = vunpack.c.l.s4 1983009808
      %v1119 = vunpack.c.0.s8 %v1118
      %v1120 = vperm.slane %v1116, %v1119
      %v1121 = vrot.slane %v1111, 4
      %v1122 = vsel %vm940, %v1121, %v1109
      %v1124 = vunpack.c.l.s4 1983009808
      %v1125 = vunpack.c.0.s8 %v1124
      %v1126 = vperm.slane %v1122, %v1125
      %v1127 = vsel %vm940, %v1114, %v1103
      %v1129 = vunpack.c.l.s4 1983009808
      %v1130 = vunpack.c.0.s8 %v1129
      %v1131 = vperm.slane %v1127, %v1130
      %v1132 = vrot.slane %v1115, 4
      %v1133 = vsel %vm940, %v1132, %v1113
      %v1135 = vunpack.c.l.s4 1983009808
      %v1136 = vunpack.c.0.s8 %v1135
      %v1137 = vperm.slane %v1133, %v1136
      %v1138 = vrot.slane %v1126, 4
      %v1139 = vsel %vm940, %v1138, %v1120
      %v1140 = vrot.slane %v1120, 4
      %v1141 = vsel %vm940, %v1126, %v1140
      %v1143 = vunpack.c.l.s4 1934713408
      %v1144 = vunpack.c.0.s8 %v1143
      %v1145 = vperm.slane %v1139, %v1144
      %v1147 = vunpack.c.l.s4 1934713408
      %v1148 = vunpack.c.0.s8 %v1147
      %v1149 = vperm.slane %v1141, %v1148
      %v1150 = vrot.slane %v1137, 4
      %v1151 = vsel %vm940, %v1150, %v1131
      %v1152 = vrot.slane %v1131, 4
      %v1153 = vsel %vm940, %v1137, %v1152
      %v1155 = vunpack.c.l.s4 1934713408
      %v1156 = vunpack.c.0.s8 %v1155
      %v1157 = vperm.slane %v1151, %v1156
      %v1159 = vunpack.c.l.s4 1934713408
      %v1160 = vunpack.c.0.s8 %v1159
      %v1161 = vperm.slane %v1153, %v1160
      %v1162 = vrot.slane %v1157, 4
      %v1163 = vsel %vm940, %v1162, %v1145
      %v1164 = vrot.slane %v1145, 4
      %v1165 = vsel %vm940, %v1157, %v1164
      %v1166 = vrot.slane %v1161, 4
      %v1167 = vsel %vm940, %v1166, %v1149
      %v1168 = vrot.slane %v1149, 4
      %v1169 = vsel %vm940, %v1161, %v1168
      %1171 = vrot.lane.b32.xlu0 %v926, 120
      %v1172 = vpop.permute.xlu0 %1171
      %1174 = vrot.lane.b32.xlu0 %v926, 112
      %v1175 = vpop.permute.xlu0 %1174
      %1177 = vrot.lane.b32.xlu0 %v926, 104
      %v1178 = vpop.permute.xlu0 %1177
      %v1180 = vrot.slane %v1175, 4
      %v1181 = vsel %vm940, %v1180, %v926
      %v1182 = vrot.slane %v926, 4
      %v1183 = vsel %vm940, %v1175, %v1182
      %v1185 = vunpack.c.l.s4 1983009808
      %v1186 = vunpack.c.0.s8 %v1185
      %v1187 = vperm.slane %v1181, %v1186
      %v1189 = vunpack.c.l.s4 1983009808
      %v1190 = vunpack.c.0.s8 %v1189
      %v1191 = vperm.slane %v1183, %v1190
      %v1192 = vrot.slane %v1178, 4
      %v1193 = vsel %vm940, %v1192, %v1172
      %v1194 = vrot.slane %v1172, 4
      %v1195 = vsel %vm940, %v1178, %v1194
      %v1197 = vunpack.c.l.s4 1983009808
      %v1198 = vunpack.c.0.s8 %v1197
      %v1199 = vperm.slane %v1193, %v1198
      %v1201 = vunpack.c.l.s4 1983009808
      %v1202 = vunpack.c.0.s8 %v1201
      %v1203 = vperm.slane %v1195, %v1202
      %v1204 = vrot.slane %v1199, 4
      %v1205 = vsel %vm940, %v1204, %v1187
      %v1206 = vrot.slane %v1187, 4
      %v1207 = vsel %vm940, %v1199, %v1206
      %v1209 = vunpack.c.l.s4 1934713408
      %v1210 = vunpack.c.0.s8 %v1209
      %v1211 = vperm.slane %v1205, %v1210
      %v1213 = vunpack.c.l.s4 1934713408
      %v1214 = vunpack.c.0.s8 %v1213
      %v1215 = vperm.slane %v1207, %v1214
      %v1216 = vrot.slane %v1203, 4
      %v1217 = vsel %vm940, %v1216, %v1191
      %v1218 = vrot.slane %v1191, 4
      %v1219 = vsel %vm940, %v1203, %v1218
      %v1221 = vunpack.c.l.s4 1934713408
      %v1222 = vunpack.c.0.s8 %v1221
      %v1223 = vperm.slane %v1217, %v1222
      %v1225 = vunpack.c.l.s4 1934713408
      %v1226 = vunpack.c.0.s8 %v1225
      %v1227 = vperm.slane %v1219, %v1226
      %v1228 = vrot.slane %v1211, 4
      %v1229 = vsel %vm940, 0.0, %v1228
      %v1230 = vrot.slane %v1215, 4
      %v1231 = vsel %vm940, 0.0, %v1230
      %v1232 = vrot.slane %v1223, 4
      %v1233 = vsel %vm940, 0.0, %v1232
      %v1234 = vrot.slane %v1227, 4
      %v1235 = vsel %vm940, 0.0, %v1234
      %v1236 = vsel %vm940, %v1230, %v1211
      %v1238 = vunpack.c.l.s4 1983009808
      %v1239 = vunpack.c.0.s8 %v1238
      %v1240 = vperm.slane %v1236, %v1239
      %v1241 = vrot.slane %v1231, 4
      %v1242 = vsel %vm940, %v1241, %v1229
      %v1244 = vunpack.c.l.s4 1983009808
      %v1245 = vunpack.c.0.s8 %v1244
      %v1246 = vperm.slane %v1242, %v1245
      %v1247 = vsel %vm940, %v1234, %v1223
      %v1249 = vunpack.c.l.s4 1983009808
      %v1250 = vunpack.c.0.s8 %v1249
      %v1251 = vperm.slane %v1247, %v1250
      %v1252 = vrot.slane %v1235, 4
      %v1253 = vsel %vm940, %v1252, %v1233
      %v1255 = vunpack.c.l.s4 1983009808
      %v1256 = vunpack.c.0.s8 %v1255
      %v1257 = vperm.slane %v1253, %v1256
      %v1258 = vrot.slane %v1246, 4
      %v1259 = vsel %vm940, %v1258, %v1240
      %v1260 = vrot.slane %v1240, 4
      %v1261 = vsel %vm940, %v1246, %v1260
      %v1263 = vunpack.c.l.s4 1934713408
      %v1264 = vunpack.c.0.s8 %v1263
      %v1265 = vperm.slane %v1259, %v1264
      %v1267 = vunpack.c.l.s4 1934713408
      %v1268 = vunpack.c.0.s8 %v1267
      %v1269 = vperm.slane %v1261, %v1268
      %v1270 = vrot.slane %v1257, 4
      %v1271 = vsel %vm940, %v1270, %v1251
      %v1272 = vrot.slane %v1251, 4
      %v1273 = vsel %vm940, %v1257, %v1272
      %v1275 = vunpack.c.l.s4 1934713408
      %v1276 = vunpack.c.0.s8 %v1275
      %v1277 = vperm.slane %v1271, %v1276
      %v1279 = vunpack.c.l.s4 1934713408
      %v1280 = vunpack.c.0.s8 %v1279
      %v1281 = vperm.slane %v1273, %v1280
      %v1282 = vrot.slane %v1277, 4
      %v1283 = vsel %vm940, %v1282, %v1265
      %v1284 = vrot.slane %v1265, 4
      %v1285 = vsel %vm940, %v1277, %v1284
      %v1286 = vrot.slane %v1281, 4
      %v1287 = vsel %vm940, %v1286, %v1269
      %v1288 = vrot.slane %v1269, 4
      %v1289 = vsel %vm940, %v1281, %v1288
      %v1290 = vpack.c.bf16 %v1043, %v1043
      %v1291 = vpack.c.bf16 %v1045, %v1045
      %v1292 = vpack.c.bf16 %v1047, %v1047
      %v1293 = vpack.c.bf16 %v1049, %v1049
      %v1294 = vpack.c.bf16 %v1163, %v1163
      %v1295 = vpack.c.bf16 %v1165, %v1165
      %v1296 = vpack.c.bf16 %v1167, %v1167
      %v1297 = vpack.c.bf16 %v1169, %v1169
      %vm1298 = vcmask 64512
      %v1300 = vsel %vm1298, %v1290, 0
      %v1303 = vsel %vm1298, %v1294, 0
      %1305 = vmatpush.bf16.xpose.msra.mxu0 0
      %1306 = vmatpush.bf16.xpose.msra.mxu0 0
      %1307 = vmatpush.bf16.xpose.msra.mxu0 0
      %1308 = vmatpush.bf16.xpose.msra.mxu0 0
      %1309 = vmatpush.bf16.xpose.msra.mxu0 0
      %1310 = vmatpush.bf16.xpose.msra.mxu0 0
      %1311 = vmatpush.bf16.xpose.msra.mxu0 0
      %1312 = vmatpush.bf16.xpose.msra.mxu0 %v1303
      %1313 = vmatmul.bf16.gmra.mxu0 %v1300
      %v1314 = vpop.f32.mrf.mxu0
      %v1315 = vadd.f32 0.0, %v1314
      %v1316 = vpop.f32.mrf.mxu0
      %1317 = vdwg.mxu0
      %v1319 = vsel %vm1298, %v1291, 0
      %v1322 = vsel %vm1298, %v1295, 0
      %1324 = vmatpush.bf16.xpose.msra.mxu0 0
      %1325 = vmatpush.bf16.xpose.msra.mxu0 0
      %1326 = vmatpush.bf16.xpose.msra.mxu0 0
      %1327 = vmatpush.bf16.xpose.msra.mxu0 0
      %1328 = vmatpush.bf16.xpose.msra.mxu0 0
      %1329 = vmatpush.bf16.xpose.msra.mxu0 0
      %1330 = vmatpush.bf16.xpose.msra.mxu0 0
      %1331 = vmatpush.bf16.xpose.msra.mxu0 %v1322
      %1332 = vmatmul.bf16.gmra.mxu0 %v1319
      %v1333 = vpop.f32.mrf.mxu0
      %v1334 = vadd.f32 0.0, %v1333
      %v1335 = vpop.f32.mrf.mxu0
      %1336 = vdwg.mxu0
      %v1338 = vsel %vm1298, %v1292, 0
      %v1341 = vsel %vm1298, %v1296, 0
      %1343 = vmatpush.bf16.xpose.msra.mxu0 0
      %1344 = vmatpush.bf16.xpose.msra.mxu0 0
      %1345 = vmatpush.bf16.xpose.msra.mxu0 0
      %1346 = vmatpush.bf16.xpose.msra.mxu0 0
      %1347 = vmatpush.bf16.xpose.msra.mxu0 0
      %1348 = vmatpush.bf16.xpose.msra.mxu0 0
      %1349 = vmatpush.bf16.xpose.msra.mxu0 0
      %1350 = vmatpush.bf16.xpose.msra.mxu0 %v1341
      %1351 = vmatmul.bf16.gmra.mxu0 %v1338
      %v1352 = vpop.f32.mrf.mxu0
      %v1353 = vadd.f32 0.0, %v1352
      %v1354 = vpop.f32.mrf.mxu0
      %1355 = vdwg.mxu0
      %v1357 = vsel %vm1298, %v1293, 0
      %v1360 = vsel %vm1298, %v1297, 0
      %1362 = vmatpush.bf16.xpose.msra.mxu0 0
      %1363 = vmatpush.bf16.xpose.msra.mxu0 0
      %1364 = vmatpush.bf16.xpose.msra.mxu0 0
      %1365 = vmatpush.bf16.xpose.msra.mxu0 0
      %1366 = vmatpush.bf16.xpose.msra.mxu0 0
      %1367 = vmatpush.bf16.xpose.msra.mxu0 0
      %1368 = vmatpush.bf16.xpose.msra.mxu0 0
      %1369 = vmatpush.bf16.xpose.msra.mxu0 %v1360
      %1370 = vmatmul.bf16.gmra.mxu0 %v1357
      %v1371 = vpop.f32.mrf.mxu0
      %v1372 = vadd.f32 0.0, %v1371
      %v1373 = vpop.f32.mrf.mxu0
      %1374 = vdwg.mxu0
      %v1375 = vmul.f32 %v1315, 0.35355338
      %v1376 = vmul.f32 %v1334, 0.35355338
      %v1377 = vmul.f32 %v1353, 0.35355338
      %v1378 = vmul.f32 %v1372, 0.35355338
      %v1379 = vlaneseq
      %v1380 = vshrl.u32 %v1379, 7
      %v1381 = vlaneseq
      %v1382 = vand.u32 %v1381, 127
      %vm1383 = vcmp.le.s32.totalorder %v1382, %v1380
      %v1384 = vsel %vm1383, 1, 0
      %vm1385 = vcmp.eq.s32.totalorder %v1384, 1
      %v1386 = vsel %vm1385, %v1375, -1e+30
      %v1387 = vsel %vm1385, %v1376, -1e+30
      %v1388 = vsel %vm1385, %v1377, -1e+30
      %v1389 = vsel %vm1385, %v1378, -1e+30
      %v1390 = vsel %vm1298, %v1386, -inf
      %1391 = vmax.xlane.f32.xlu0 %v1390
      %v1392 = vpop.xlane.xlu0 %1391
      %v1393 = vsel %vm1298, %v1387, -inf
      %1394 = vmax.xlane.f32.xlu0 %v1393
      %v1395 = vpop.xlane.xlu0 %1394
      %v1396 = vsel %vm1298, %v1388, -inf
      %1397 = vmax.xlane.f32.xlu0 %v1396
      %v1398 = vpop.xlane.xlu0 %1397
      %v1399 = vsel %vm1298, %v1389, -inf
      %1400 = vmax.xlane.f32.xlu0 %v1399
      %v1401 = vpop.xlane.xlu0 %1400
      %v1402 = vsub.f32 %v1386, %v1392
      %v1403 = vsub.f32 %v1387, %v1395
      %v1404 = vsub.f32 %v1388, %v1398
      %v1405 = vsub.f32 %v1389, %v1401
      %v1406 = vmul.f32 %v1402, 1.442695
      %v1407 = vpow.pop %v1406
      %v1408 = vmul.f32 %v1403, 1.442695
      %v1409 = vpow.pop %v1408
      %v1410 = vmul.f32 %v1404, 1.442695
      %v1411 = vpow.pop %v1410
      %v1412 = vmul.f32 %v1405, 1.442695
      %v1413 = vpow.pop %v1412
      %v1414 = vsel %vm1298, %v1407, 0.0
      %1415 = vadd.xlane.f32.xlu0 %v1414
      %v1416 = vpop.xlane.xlu0 %1415
      %v1417 = vsel %vm1298, %v1409, 0.0
      %1418 = vadd.xlane.f32.xlu0 %v1417
      %v1419 = vpop.xlane.xlu0 %1418
      %v1420 = vsel %vm1298, %v1411, 0.0
      %1421 = vadd.xlane.f32.xlu0 %v1420
      %v1422 = vpop.xlane.xlu0 %1421
      %v1423 = vsel %vm1298, %v1413, 0.0
      %1424 = vadd.xlane.f32.xlu0 %v1423
      %v1425 = vpop.xlane.xlu0 %1424
      %v1426 = vrcp.pop %v1416
      %v1427 = vrcp.pop %v1419
      %v1428 = vrcp.pop %v1422
      %v1429 = vrcp.pop %v1425
      %v1430 = vmul.f32 %v1407, %v1426
      %v1431 = vmul.f32 %v1409, %v1427
      %v1432 = vmul.f32 %v1411, %v1428
      %v1433 = vmul.f32 %v1413, %v1429
      %v1434 = vpack.c.bf16 %v1430, %v1430
      %v1435 = vpack.c.bf16 %v1431, %v1431
      %v1436 = vpack.c.bf16 %v1432, %v1432
      %v1437 = vpack.c.bf16 %v1433, %v1433
      %v1438 = vpack.c.bf16 %v1283, %v1283
      %v1439 = vpack.c.bf16 %v1285, %v1285
      %v1440 = vpack.c.bf16 %v1287, %v1287
      %v1441 = vpack.c.bf16 %v1289, %v1289
      %v1443 = vsel %vm1298, %v1434, 0
      %vm1445 = vcmask 1043456
      %v1447 = vsel %vm1445, %v1438, 0
      %1449 = vmatpush.bf16.msra.mxu0 0
      %1450 = vmatpush.bf16.msra.mxu0 0
      %1451 = vmatpush.bf16.msra.mxu0 0
      %1452 = vmatpush.bf16.msra.mxu0 0
      %1453 = vmatpush.bf16.msra.mxu0 0
      %1454 = vmatpush.bf16.msra.mxu0 0
      %1455 = vmatpush.bf16.msra.mxu0 0
      %1456 = vmatpush.bf16.msra.mxu0 %v1447
      %1457 = vmatmul.bf16.gmra.mxu0 %v1443
      %v1458 = vpop.f32.mrf.mxu0
      %v1459 = vadd.f32 0.0, %v1458
      %v1460 = vpop.f32.mrf.mxu0
      %1461 = vdwg.mxu0
      %v1463 = vsel %vm1298, %v1435, 0
      %v1466 = vsel %vm1445, %v1439, 0
      %1468 = vmatpush.bf16.msra.mxu0 0
      %1469 = vmatpush.bf16.msra.mxu0 0
      %1470 = vmatpush.bf16.msra.mxu0 0
      %1471 = vmatpush.bf16.msra.mxu0 0
      %1472 = vmatpush.bf16.msra.mxu0 0
      %1473 = vmatpush.bf16.msra.mxu0 0
      %1474 = vmatpush.bf16.msra.mxu0 0
      %1475 = vmatpush.bf16.msra.mxu0 %v1466
      %1476 = vmatmul.bf16.gmra.mxu0 %v1463
      %v1477 = vpop.f32.mrf.mxu0
      %v1478 = vadd.f32 0.0, %v1477
      %v1479 = vpop.f32.mrf.mxu0
      %1480 = vdwg.mxu0
      %v1482 = vsel %vm1298, %v1436, 0
      %v1485 = vsel %vm1445, %v1440, 0
      %1487 = vmatpush.bf16.msra.mxu0 0
      %1488 = vmatpush.bf16.msra.mxu0 0
      %1489 = vmatpush.bf16.msra.mxu0 0
      %1490 = vmatpush.bf16.msra.mxu0 0
      %1491 = vmatpush.bf16.msra.mxu0 0
      %1492 = vmatpush.bf16.msra.mxu0 0
      %1493 = vmatpush.bf16.msra.mxu0 0
      %1494 = vmatpush.bf16.msra.mxu0 %v1485
      %1495 = vmatmul.bf16.gmra.mxu0 %v1482
      %v1496 = vpop.f32.mrf.mxu0
      %v1497 = vadd.f32 0.0, %v1496
      %v1498 = vpop.f32.mrf.mxu0
      %1499 = vdwg.mxu0
      %v1501 = vsel %vm1298, %v1437, 0
      %v1504 = vsel %vm1445, %v1441, 0
      %1506 = vmatpush.bf16.msra.mxu0 0
      %1507 = vmatpush.bf16.msra.mxu0 0
      %1508 = vmatpush.bf16.msra.mxu0 0
      %1509 = vmatpush.bf16.msra.mxu0 0
      %1510 = vmatpush.bf16.msra.mxu0 0
      %1511 = vmatpush.bf16.msra.mxu0 0
      %1512 = vmatpush.bf16.msra.mxu0 0
      %1513 = vmatpush.bf16.msra.mxu0 %v1504
      %1514 = vmatmul.bf16.gmra.mxu0 %v1501
      %v1515 = vpop.f32.mrf.mxu0
      %v1516 = vadd.f32 0.0, %v1515
      %v1517 = vpop.f32.mrf.mxu0
      %1518 = vdwg.mxu0
      %v1519 = vrot.slane %v1497, 4
      %v1520 = vsel %vm940, %v1519, %v1459
      %v1521 = vrot.slane %v1459, 4
      %v1522 = vsel %vm940, %v1497, %v1521
      %v1524 = vunpack.c.l.s4 1983009808
      %v1525 = vunpack.c.0.s8 %v1524
      %v1526 = vperm.slane %v1520, %v1525
      %v1528 = vunpack.c.l.s4 1983009808
      %v1529 = vunpack.c.0.s8 %v1528
      %v1530 = vperm.slane %v1522, %v1529
      %v1531 = vrot.slane %v1516, 4
      %v1532 = vsel %vm940, %v1531, %v1478
      %v1533 = vrot.slane %v1478, 4
      %v1534 = vsel %vm940, %v1516, %v1533
      %v1536 = vunpack.c.l.s4 1983009808
      %v1537 = vunpack.c.0.s8 %v1536
      %v1538 = vperm.slane %v1532, %v1537
      %v1540 = vunpack.c.l.s4 1983009808
      %v1541 = vunpack.c.0.s8 %v1540
      %v1542 = vperm.slane %v1534, %v1541
      %v1543 = vrot.slane %v1538, 4
      %v1544 = vsel %vm940, %v1543, %v1526
      %v1545 = vrot.slane %v1526, 4
      %v1546 = vsel %vm940, %v1538, %v1545
      %v1548 = vunpack.c.l.s4 1934713408
      %v1549 = vunpack.c.0.s8 %v1548
      %v1550 = vperm.slane %v1544, %v1549
      %v1552 = vunpack.c.l.s4 1934713408
      %v1553 = vunpack.c.0.s8 %v1552
      %v1554 = vperm.slane %v1546, %v1553
      %v1555 = vrot.slane %v1542, 4
      %v1556 = vsel %vm940, %v1555, %v1530
      %v1557 = vrot.slane %v1530, 4
      %v1558 = vsel %vm940, %v1542, %v1557
      %v1560 = vunpack.c.l.s4 1934713408
      %v1561 = vunpack.c.0.s8 %v1560
      %v1562 = vperm.slane %v1556, %v1561
      %v1564 = vunpack.c.l.s4 1934713408
      %v1565 = vunpack.c.0.s8 %v1564
      %v1566 = vperm.slane %v1558, %v1565
      %v1567 = vrot.slane %v1550, 4
      %v1568 = vsel %vm940, 0.0, %v1567
      %v1569 = vrot.slane %v1554, 4
      %v1570 = vsel %vm940, 0.0, %v1569
      %v1571 = vrot.slane %v1562, 4
      %v1572 = vsel %vm940, 0.0, %v1571
      %v1573 = vrot.slane %v1566, 4
      %v1574 = vsel %vm940, 0.0, %v1573
      %v1575 = vsel %vm940, %v1569, %v1550
      %v1577 = vunpack.c.l.s4 1983009808
      %v1578 = vunpack.c.0.s8 %v1577
      %v1579 = vperm.slane %v1575, %v1578
      %v1580 = vrot.slane %v1570, 4
      %v1581 = vsel %vm940, %v1580, %v1568
      %v1583 = vunpack.c.l.s4 1983009808
      %v1584 = vunpack.c.0.s8 %v1583
      %v1585 = vperm.slane %v1581, %v1584
      %v1586 = vsel %vm940, %v1573, %v1562
      %v1588 = vunpack.c.l.s4 1983009808
      %v1589 = vunpack.c.0.s8 %v1588
      %v1590 = vperm.slane %v1586, %v1589
      %v1591 = vrot.slane %v1574, 4
      %v1592 = vsel %vm940, %v1591, %v1572
      %v1594 = vunpack.c.l.s4 1983009808
      %v1595 = vunpack.c.0.s8 %v1594
      %v1596 = vperm.slane %v1592, %v1595
      %v1597 = vrot.slane %v1585, 4
      %v1598 = vsel %vm940, %v1597, %v1579
      %v1599 = vrot.slane %v1579, 4
      %v1600 = vsel %vm940, %v1585, %v1599
      %v1602 = vunpack.c.l.s4 1934713408
      %v1603 = vunpack.c.0.s8 %v1602
      %v1604 = vperm.slane %v1598, %v1603
      %v1606 = vunpack.c.l.s4 1934713408
      %v1607 = vunpack.c.0.s8 %v1606
      %v1608 = vperm.slane %v1600, %v1607
      %v1609 = vrot.slane %v1596, 4
      %v1610 = vsel %vm940, %v1609, %v1590
      %v1611 = vrot.slane %v1590, 4
      %v1612 = vsel %vm940, %v1596, %v1611
      %v1614 = vunpack.c.l.s4 1934713408
      %v1615 = vunpack.c.0.s8 %v1614
      %v1616 = vperm.slane %v1610, %v1615
      %v1618 = vunpack.c.l.s4 1934713408
      %v1619 = vunpack.c.0.s8 %v1618
      %v1620 = vperm.slane %v1612, %v1619
      %v1621 = vrot.slane %v1616, 4
      %v1622 = vsel %vm940, %v1621, %v1604
      %v1623 = vrot.slane %v1604, 4
      %v1624 = vsel %vm940, %v1616, %v1623
      %v1625 = vrot.slane %v1620, 4
      %v1626 = vsel %vm940, %v1625, %v1608
      %v1627 = vrot.slane %v1608, 4
      %v1628 = vsel %vm940, %v1620, %v1627
      %1630 = vrot.lane.b32.xlu0 %v1624, 8
      %v1631 = vpop.permute.xlu0 %1630
      %1634 = vrot.lane.b32.xlu0 %v1626, 16
      %v1635 = vpop.permute.xlu0 %1634
      %1638 = vrot.lane.b32.xlu0 %v1628, 24
      %v1639 = vpop.permute.xlu0 %1638
      %v1641 = vsel %vm1298, %v1622, %v1631
      %vm1642 = vcmask 130048
      %v1643 = vsel %vm1642, %v1641, %v1635
      %vm1644 = vcmask 195584
      %v1645 = vsel %vm1644, %v1643, %v1639
      %v1646 = vpack.c.bf16 %v1645, %v1645
      %v1647 = vld [vmem:[%s807] sm:$0xff]
      %v1648 = vld [vmem:[%s807 + $0x8] sm:$0xff]
      %v1649 = vld [vmem:[%s807 + $0x10] sm:$0xff]
      %v1650 = vld [vmem:[%s807 + $0x18] sm:$0xff]
      %v1651 = vpack.c.bf16 %v1648, %v1647
      %v1652 = vpack.c.bf16 %v1650, %v1649
      %v1653 = vld [vmem:[%s810] sm:$0x1]
      %v1655 = vperm.slane %v1653, 0
      %v1658 = vsel %vm866, %v1646, 0
      %1660 = vmatpush.bf16.msra.mxu0 0
      %1661 = vmatpush.bf16.msra.mxu0 0
      %1662 = vmatpush.bf16.msra.mxu0 0
      %1663 = vmatpush.bf16.msra.mxu0 0
      %1664 = vmatpush.bf16.msra.mxu0 0
      %1665 = vmatpush.bf16.msra.mxu0 0
      %1666 = vmatpush.bf16.msra.mxu0 %v1652
      %1667 = vmatpush.bf16.msra.mxu0 %v1651
      %1668 = vmatmul.bf16.gmra.mxu0 %v1658
      %v1669 = vpop.f32.mrf.mxu0
      %v1670 = vadd.f32 %v1655, %v1669
      %v1671 = vpop.f32.mrf.mxu0
      %1672 = vdwg.mxu0
      %v1673 = vadd.f32 %v854, %v1670
      %v1674 = vld [vmem:[%s813] sm:$0x1]
      %v1675 = vld [vmem:[%s816] sm:$0x1]
      %v1676 = vsel %vm866, %v1673, 0.0
      %1677 = vadd.xlane.f32.xlu0 %v1676
      %v1678 = vpop.xlane.xlu0 %1677
      %v1679 = vrcp.pop 32.0
      %v1680 = vmul.f32 32.0, %v1679
      %v1681 = vsub.f32 1.0, %v1680
      %v1682 = vmul.f32 %v1679, %v1681
      %v1683 = vadd.f32 %v1679, %v1682
      %vm1684 = vweird.f32 %v1679
      %v1685 = vsel %vm1684, %v1679, %v1683
      %v1686 = vmul.f32 %v1678, %v1685
      %v1687 = vsub.f32 %v1673, %v1686
      %v1688 = vmul.f32 %v1687, %v1687
      %v1689 = vsel %vm866, %v1688, 0.0
      %1690 = vadd.xlane.f32.xlu0 %v1689
      %v1691 = vpop.xlane.xlu0 %1690
      %v1692 = vmul.f32 %v1691, %v1685
      %v1693 = vadd.f32 %v1692, 1e-05
      %v1694 = vrsqrt.pop %v1693
      %v1695 = vmul.f32 %v1694, %v1693
      %v1696 = vmul.f32 %v1695, %v1694
      %v1697 = vmul.f32 0.5, %v1696
      %v1698 = vsub.f32 1.5, %v1697
      %v1699 = vmul.f32 %v1694, %v1698
      %vm1700 = vweird.f32 %v1693
      %vm1701 = vweird.f32 %v1694
      %vm1702 = vmor %vm1700, %vm1701
      %v1703 = vsel %vm1702, %v1694, %v1699
      %v1704 = vmul.f32 %v1687, %v1703
      %v1706 = vperm.slane %v1674, 0
      %v1708 = vmul.f32 %v1704, %v1706
      %v1710 = vperm.slane %v1675, 0
      %v1712 = vadd.f32 %v1708, %v1710
      %v1713 = vpack.c.bf16 %v1712, %v1712
      %v1714 = vld [vmem:[%s821] sm:$0xff]
      %v1715 = vld [vmem:[%s821 + $0x8] sm:$0xff]
      %v1716 = vld [vmem:[%s821 + $0x10] sm:$0xff]
      %v1717 = vld [vmem:[%s821 + $0x18] sm:$0xff]
      %v1718 = vpack.c.bf16 %v1715, %v1714
      %v1719 = vpack.c.bf16 %v1717, %v1716
      %v1720 = vld [vmem:[%s824] sm:$0x1]
      %v1722 = vperm.slane %v1720, 0
      %v1725 = vsel %vm866, %v1713, 0
      %1727 = vmatpush.bf16.msra.mxu0 0
      %1728 = vmatpush.bf16.msra.mxu0 0
      %1729 = vmatpush.bf16.msra.mxu0 0
      %1730 = vmatpush.bf16.msra.mxu0 0
      %1731 = vmatpush.bf16.msra.mxu0 0
      %1732 = vmatpush.bf16.msra.mxu0 0
      %1733 = vmatpush.bf16.msra.mxu0 %v1719
      %1734 = vmatpush.bf16.msra.mxu0 %v1718
      %1735 = vmatmul.bf16.gmra.mxu0 %v1725
      %v1736 = vpop.f32.mrf.mxu0
      %v1737 = vadd.f32 %v1722, %v1736
      %v1738 = vpop.f32.mrf.mxu0
      %1739 = vdwg.mxu0
      %v1740 = vmax.f32 %v1737, 0.0
      %v1741 = vpack.c.bf16 %v1740, %v1740
      %v1742 = vld [vmem:[%s829] sm:$0xff]
      %v1743 = vld [vmem:[%s829 + $0x8] sm:$0xff]
      %v1744 = vld [vmem:[%s829 + $0x10] sm:$0xff]
      %v1745 = vld [vmem:[%s829 + $0x18] sm:$0xff]
      %v1746 = vld [vmem:[%s829 + $0x20] sm:$0xff]
      %v1747 = vld [vmem:[%s829 + $0x28] sm:$0xff]
      %v1748 = vld [vmem:[%s829 + $0x30] sm:$0xff]
      %v1749 = vld [vmem:[%s829 + $0x38] sm:$0xff]
      %v1750 = vpack.c.bf16 %v1743, %v1742
      %v1751 = vpack.c.bf16 %v1745, %v1744
      %v1752 = vpack.c.bf16 %v1747, %v1746
      %v1753 = vpack.c.bf16 %v1749, %v1748
      %v1754 = vld [vmem:[%s832] sm:$0x1]
      %v1756 = vperm.slane %v1754, 0
      %vm1758 = vcmask 523264
      %v1760 = vsel %vm1758, %v1741, 0
      %1762 = vmatpush.bf16.msra.mxu0 0
      %1763 = vmatpush.bf16.msra.mxu0 0
      %1764 = vmatpush.bf16.msra.mxu0 0
      %1765 = vmatpush.bf16.msra.mxu0 0
      %1766 = vmatpush.bf16.msra.mxu0 %v1753
      %1767 = vmatpush.bf16.msra.mxu0 %v1752
      %1768 = vmatpush.bf16.msra.mxu0 %v1751
      %1769 = vmatpush.bf16.msra.mxu0 %v1750
      %1770 = vmatmul.bf16.gmra.mxu0 %v1760
      %v1771 = vpop.f32.mrf.mxu0
      %v1772 = vadd.f32 %v1756, %v1771
      %v1773 = vpop.f32.mrf.mxu0
      %1774 = vdwg.mxu0
      %v1775 = vadd.f32 %v1712, %v1772
      %v1776 = vld [vmem:[%s835] sm:$0x1]
      %v1777 = vld [vmem:[%s838] sm:$0x1]
      %v1778 = vsel %vm866, %v1775, 0.0
      %1779 = vadd.xlane.f32.xlu0 %v1778
      %v1780 = vpop.xlane.xlu0 %1779
      %v1781 = vmul.f32 %v1780, %v1685
      %v1782 = vsub.f32 %v1775, %v1781
      %v1783 = vmul.f32 %v1782, %v1782
      %v1784 = vsel %vm866, %v1783, 0.0
      %1785 = vadd.xlane.f32.xlu0 %v1784
      %v1786 = vpop.xlane.xlu0 %1785
      %v1787 = vmul.f32 %v1786, %v1685
      %v1788 = vadd.f32 %v1787, 1e-05
      %v1789 = vrsqrt.pop %v1788
      %v1790 = vmul.f32 %v1789, %v1788
      %v1791 = vmul.f32 %v1790, %v1789
      %v1792 = vmul.f32 0.5, %v1791
      %v1793 = vsub.f32 1.5, %v1792
      %v1794 = vmul.f32 %v1789, %v1793
      %vm1795 = vweird.f32 %v1788
      %vm1796 = vweird.f32 %v1789
      %vm1797 = vmor %vm1795, %vm1796
      %v1798 = vsel %vm1797, %v1789, %v1794
      %v1799 = vmul.f32 %v1782, %v1798
      %v1801 = vperm.slane %v1776, 0
      %v1803 = vmul.f32 %v1799, %v1801
      %v1805 = vperm.slane %v1777, 0
      %v1807 = vadd.f32 %v1803, %v1805
      %1808 = vst.msk [vmem:[#allocation2] sm:$0xff] %vm866, %v1807
      %p1809 = scmp.eq.s32.totalorder %s34, 1
      // Predicated region
      $region97: #{transformer_forward.1} parent=91 // pred_check
        %p1810 = pneg %p1809
      $region98: #{transformer_forward.1} parent=91 // pred_check_branch
        %1812 = sbr.rel (%p1810) target = $region100
      $region99: #{transformer_forward.1} parent=91 // pred_region
        %1813 = vst.msk [vmem:[%s842] sm:$0xff] %vm866, %v1807
      $region100: #{transformer_forward.1} parent=91 // pred_fallthru
        _
      %p1814 = scmp.lt.s32.totalorder %s33, 1
      %s1815 = scalar_select %p1814, %s33, 1
      %s1816 = smul.addr %s1815, 8
      %s1817 = scalar_lea.vmem %s18, %s1816
      // Predicated region
      $region101: #{transformer_forward.1} parent=91 // pred_check
        %p1818 = pneg %p522
      $region102: #{transformer_forward.1} parent=91 // pred_check_branch
        %1820 = sbr.rel (%p1818) target = $region104
      $region103: #{transformer_forward.1} parent=91 // pred_region
        _
      $region104: #{transformer_forward.1} parent=91 // pred_fallthru
        _
    $region92: #{transformer_forward.1} parent=5 // pred_fallthru
      _
    %p1821 = scmp.le.s32.totalorder 2, %s24
    // Predicated region
    $region105: #{transformer_forward.1} parent=5 // pred_check
      %p1822 = pneg %p1821
    $region106: #{transformer_forward.1} parent=5 // pred_check_branch
      %1824 = sbr.rel (%p1822) target = $region108
    $region107: #{transformer_forward.1} parent=5 // pred_region
      %s1825 = ssub.s32 %s24, 2
      // Predicated region
      $region109: #{transformer_forward.1} parent=107 // pred_check
        %p1826 = pneg %p528
      $region110: #{transformer_forward.1} parent=107 // pred_check_branch
        %1828 = sbr.rel (%p1826) target = $region112
      $region111: #{transformer_forward.1} parent=107 // pred_region
        %p1829 = scmp.lt.s32.totalorder %s35, 1
        %s1830 = scalar_select %p1829, %s35, 1
        %s1831 = smul.addr %s1830, 8
        %s1832 = scalar_lea.vmem %s18, %s1831
      $region112: #{transformer_forward.1} parent=107 // pred_fallthru
        _
    $region108: #{transformer_forward.1} parent=5 // pred_fallthru
      _
  $region6: #{transformer_forward.1} parent=0 // loop_footer
    %s28 = sadd.s32 1, %s24
  $region7: #{transformer_forward.1} parent=0 // loop_footer_branch
    %23 = sbr.rel target = $region3
  $region8: #{transformer_forward.1} parent=0 // loop_exit
    _

</llo_original>
